<compile_context>
chip_gen: v6e
topology: v6e:2x2x1
jax: 0.10.0
libtpu: 0.0.40
codegen_flags: <defaults>
</compile_context>

<pallas_src>
import jax
import jax.numpy as jnp
from jax.experimental import pallas as pl
from jax.experimental.pallas import tpu as pltpu


def _round_up(x: int, m: int) -> int:
    return ((x + m - 1) // m) * m


# -----------------------------------------------------------------------------
# One-time parameter packing (kept out of the per-call path).
# -----------------------------------------------------------------------------
class PackedFFN:
    """Lane-padded, dtype-converted FeedForward parameters."""

    def __init__(self, params, matmul_dtype=jnp.bfloat16, lane_align=128):
        # params: [(W [fan_in, fan_out], b [fan_out]), ...]
        #   params[0]   : in_features -> hidden
        #   params[1:-1]: hidden      -> hidden   (num_hidden_layers of them)
        #   params[-1]  : hidden      -> out_features
        assert len(params) >= 2
        self.matmul_dtype = matmul_dtype
        self.in_features = int(params[0][0].shape[0])
        self.hidden = int(params[0][0].shape[1])
        self.out_features = int(params[-1][0].shape[1])
        self.num_hidden_layers = len(params) - 2

        # NOTE: lane_align=256 better fills the v6e/v7x 256x256 MXU when the true
        # feature dims are >= 256; 128 is optimal on v5e and for small dims.
        self.P_in = _round_up(self.in_features, lane_align)
        self.P_h = _round_up(self.hidden, lane_align)
        self.P_out = _round_up(self.out_features, lane_align)

        W0, b0 = params[0]
        self.w_first = (jnp.zeros((self.P_in, self.P_h), matmul_dtype)
                        .at[: self.in_features, : self.hidden]
                        .set(W0.astype(matmul_dtype)))
        self.b_first = (jnp.zeros((1, self.P_h), jnp.float32)
                        .at[0, : self.hidden].set(b0.astype(jnp.float32)))

        if self.num_hidden_layers > 0:
            wh = jnp.zeros((self.num_hidden_layers, self.P_h, self.P_h), matmul_dtype)
            bh = jnp.zeros((self.num_hidden_layers, 1, self.P_h), jnp.float32)
            for i in range(self.num_hidden_layers):
                W, b = params[1 + i]
                wh = wh.at[i, : self.hidden, : self.hidden].set(W.astype(matmul_dtype))
                bh = bh.at[i, 0, : self.hidden].set(b.astype(jnp.float32))
            self.w_hidden, self.b_hidden = wh, bh
        else:
            self.w_hidden = self.b_hidden = None

        WL, bL = params[-1]
        self.w_last = (jnp.zeros((self.P_h, self.P_out), matmul_dtype)
                       .at[: self.hidden, : self.out_features]
                       .set(WL.astype(matmul_dtype)))
        self.b_last = (jnp.zeros((1, self.P_out), jnp.float32)
                       .at[0, : self.out_features].set(bL.astype(jnp.float32)))

    def weight_bytes(self) -> int:
        arrs = [self.w_first, self.b_first, self.w_last, self.b_last]
        if self.w_hidden is not None:
            arrs += [self.w_hidden, self.b_hidden]
        return int(sum(a.size * a.dtype.itemsize for a in arrs))


# -----------------------------------------------------------------------------
# Kernel body: whole MLP on one batch tile, all weights VMEM-resident.
# -----------------------------------------------------------------------------
def make_feedforward_kernel(num_hidden_layers, out_features, task_type, matmul_dtype):
    def kernel(*refs):
        if num_hidden_layers > 0:
            x_ref, w0_ref, b0_ref, wh_ref, bh_ref, wl_ref, bl_ref, o_ref = refs
        else:
            x_ref, w0_ref, b0_ref, wl_ref, bl_ref, o_ref = refs
            wh_ref = bh_ref = None

        # First linear: [TB, P_in] @ [P_in, P_h]  (bf16 x bf16 -> f32 on the MXU).
        h = jnp.dot(x_ref[...], w0_ref[...], preferred_element_type=jnp.float32)
        h = h + b0_ref[...]
        h = jnp.maximum(h, 0.0)                     # activation_function = nn.ReLU
        # TODO(synk): nn.Dropout is identity in eval mode; training-mode random
        # masking is not implemented here.

        for i in range(num_hidden_layers):          # statically unrolled
            h = jnp.dot(h.astype(matmul_dtype), wh_ref[i],
                        preferred_element_type=jnp.float32)
            h = h + bh_ref[i]
            h = jnp.maximum(h, 0.0)

        # Output linear: [TB, P_h] @ [P_h, P_out].
        h = jnp.dot(h.astype(matmul_dtype), wl_ref[...],
                    preferred_element_type=jnp.float32)
        h = h + bl_ref[...]

        if task_type == "multi_classification":
            # Mask padded logit lanes so they do not contribute to the softmax sum.
            lane = jax.lax.broadcasted_iota(jnp.int32, h.shape, dimension=1)
            h = jnp.where(lane < out_features, h, jnp.full_like(h, -1e30))
            m = jnp.max(h, axis=-1, keepdims=True)
            e = jnp.exp(h - m)
            denom = jnp.sum(e, axis=-1, keepdims=True)
            h = e / denom                # exact divide: rows sum to 1 (f32 rounding)
        elif task_type == "binary_classification":
            h = 1.0 / (1.0 + jnp.exp(-h))            # exact sigmoid
        # 'regression' -> Identity

        o_ref[...] = h.astype(o_ref.dtype)

    return kernel


# -----------------------------------------------------------------------------
# Wrapper: batch-tiled grid, resident weights, per-generation-safe VMEM budget.
# -----------------------------------------------------------------------------
def feedforward_pallas(x, packed: PackedFFN, task_type, *, block_batch=256):
    B, in_features = x.shape
    assert in_features == packed.in_features
    out_dtype = x.dtype
    mm_dtype = packed.matmul_dtype
    P_in, P_h, P_out = packed.P_in, packed.P_h, packed.P_out

    # Batch tile: multiple of 16 rows (bf16 packs 16 rows per vreg sublane-pair),
    # <= block_batch (256 keeps the f32 intermediate small enough for v7x's
    # 64 MiB VMEM).  When B > 16 cap TB so the grid has >= 2 steps and the
    # "parallel" axis can split across v7x's two TensorCores.
    TB = min(_round_up(B, 16), _round_up(block_batch, 16))
    if B > 16:
        TB = min(TB, _round_up(pl.cdiv(B, 2), 16))
    B_pad = _round_up(B, TB)
    grid = (B_pad // TB,)

    # Zero-pad activations: zeros propagate unchanged through zero weight/bias
    # columns and ReLU; padded logit lanes are masked before the softmax; the
    # wrapper slices off padded rows/lanes at the end.
    x_pad = (jnp.zeros((B_pad, P_in), mm_dtype)
             .at[:B, :in_features].set(x.astype(mm_dtype)))

    kernel = make_feedforward_kernel(packed.num_hidden_layers, packed.out_features,
                                     task_type, mm_dtype)

    def run(single_buffer_weights: bool):
        def resident_spec(shape):
            zeros = (0,) * len(shape)
            if single_buffer_weights:
                # Constant index_map -> double buffering buys nothing; Buffered(1)
                # halves resident weight VMEM.
                return pl.BlockSpec(shape, lambda i: zeros,
                                    pipeline_mode=pl.Buffered(1))
            return pl.BlockSpec(shape, lambda i: zeros)

        in_specs = [pl.BlockSpec((TB, P_in), lambda i: (i, 0)),
                    resident_spec((P_in, P_h)),
                    resident_spec((1, P_h))]
        args = [x_pad, packed.w_first, packed.b_first]
        if packed.num_hidden_layers > 0:
            in_specs += [resident_spec((packed.num_hidden_layers, P_h, P_h)),
                         resident_spec((packed.num_hidden_layers, 1, P_h))]
            args += [packed.w_hidden, packed.b_hidden]
        in_specs += [resident_spec((P_h, P_out)), resident_spec((1, P_out))]
        args += [packed.w_last, packed.b_last]

        # VMEM budget: resident weights (x1 single-buffered / x2 default),
        # double-buffered activation in/out tiles, live f32 intermediate (~2
        # copies while a layer runs), plus fixed headroom.  Clamp to the device's
        # physical VMEM (v7x = 64 MiB per TensorCore; never request 100 MiB).
        isz = lambda dt: jnp.dtype(dt).itemsize
        wbuf = 1 if single_buffer_weights else 2
        act_bytes = TB * P_in * isz(mm_dtype) + TB * P_out * isz(out_dtype)
        f32_live = 2 * TB * max(P_h, P_out) * 4
        needed = wbuf * packed.weight_bytes() + 2 * act_bytes + f32_live + (2 << 20)
        try:
            cap = int(0.85 * pltpu.get_tpu_info().vmem_capacity_bytes)
        except Exception:
            cap = 48 << 20            # conservative: below v7x's 64 MiB
        vmem_limit = int(min(cap, max(16 << 20, needed)))
        # TODO(synk): if resident weights ever exceed the VMEM budget, switch to
        # per-layer weight streaming (second 'arbitrary' grid axis / emit_pipeline).

        out_pad = pl.pallas_call(
            kernel,
            out_shape=jax.ShapeDtypeStruct((B_pad, P_out), out_dtype),
            grid=grid,
            in_specs=in_specs,
            out_specs=pl.BlockSpec((TB, P_out), lambda i: (i, 0)),
            compiler_params=pltpu.CompilerParams(
                dimension_semantics=("parallel",),       # megacore batch split
                vmem_limit_bytes=vmem_limit,
            ),
        )(*args)
        return jax.block_until_ready(out_pad)

    try:
        out_pad = run(single_buffer_weights=True)
    except Exception:
        # Installed Pallas without pipeline_mode=Buffered support: fall back to
        # the default double-buffered resident weights (correctness unchanged).
        out_pad = run(single_buffer_weights=False)

    return out_pad[:B, : packed.out_features]


# -----------------------------------------------------------------------------
# Pure-JAX reference (mirrors the kernel's precision choices, eval mode).
# -----------------------------------------------------------------------------
def feedforward_reference(x, params, task_type, *, matmul_dtype=jnp.bfloat16):
    h = x
    n = len(params)
    for i, (W, b) in enumerate(params):
        h = jnp.dot(h.astype(matmul_dtype), W.astype(matmul_dtype),
                    preferred_element_type=jnp.float32)
        h = h + b.astype(jnp.float32)
        if i < n - 1:
            h = jnp.maximum(h, 0.0)
    if task_type == "multi_classification":
        h = jax.nn.softmax(h, axis=1)
    elif task_type == "binary_classification":
        h = jax.nn.sigmoid(h)
    return h.astype(x.dtype)


def init_linear(key, fan_in, fan_out, dtype=jnp.float32):
    """PyTorch nn.Linear default init: U(-k, k), k = 1/sqrt(fan_in)."""
    kw, kb = jax.random.split(key)
    k = 1.0 / jnp.sqrt(jnp.asarray(fan_in, dtype))
    W = jax.random.uniform(kw, (fan_in, fan_out), dtype, minval=-k, maxval=k)
    b = jax.random.uniform(kb, (fan_out,), dtype, minval=-k, maxval=k)
    return W, b


if __name__ == "__main__":
    # Module config (activation_function=nn.ReLU, task_type='multi_classification')
    batch = 8
    in_features = 32
    num_hidden_neurons = 64
    num_hidden_layers = 2
    out_features = 16
    task_type = "multi_classification"

    key = jax.random.PRNGKey(0)
    keys = jax.random.split(key, num_hidden_layers + 3)

    # Parameter list: first linear, hidden linears, output linear.
    params = [init_linear(keys[0], in_features, num_hidden_neurons)]
    for i in range(num_hidden_layers):
        params.append(init_linear(keys[1 + i], num_hidden_neurons, num_hidden_neurons))
    params.append(init_linear(keys[-2], num_hidden_neurons, out_features))

    x = jax.random.normal(keys[-1], (batch, in_features), dtype=jnp.float32)

    # Pack weights once, outside the per-call path.
    packed = PackedFFN(params)

    out = feedforward_pallas(x, packed, task_type)
    out = jax.block_until_ready(out)

    ref = feedforward_reference(x, params, task_type)
    assert out.shape == (batch, out_features)
    assert jnp.allclose(out, ref, atol=1e-3, rtol=1e-3), "Pallas output mismatch vs reference"
    # Exact-divide softmax: rows sum to 1 up to f32 rounding.
    assert jnp.allclose(jnp.sum(out, axis=1), 1.0, atol=1e-4)

    # Also exercise the 'regression' (Identity) final-activation path.
    out_reg = jax.block_until_ready(feedforward_pallas(x, packed, "regression"))
    ref_reg = feedforward_reference(x, params, "regression")
    assert jnp.allclose(out_reg, ref_reg, atol=1e-3, rtol=1e-3)

    print("KERNEL_OK")
</pallas_src>

<mosaic_0001>
module attributes {stable_mosaic.version = 11 : i64} {
  func.func @kernel(%arg0: i32, %arg1: memref<16x128xbf16, #tpu.memory_space<vmem>>, %arg2: memref<128x128xbf16, #tpu.memory_space<vmem>>, %arg3: memref<1x128xf32, #tpu.memory_space<vmem>>, %arg4: memref<2x128x128xbf16, #tpu.memory_space<vmem>>, %arg5: memref<2x1x128xf32, #tpu.memory_space<vmem>>, %arg6: memref<128x128xbf16, #tpu.memory_space<vmem>>, %arg7: memref<1x128xf32, #tpu.memory_space<vmem>>, %arg8: memref<16x128xf32, #tpu.memory_space<vmem>>) attributes {dimension_semantics = [#tpu.dimension_semantics<parallel>], iteration_bounds = array<i64: 1>, scalar_prefetch = 0 : i64, scratch_operands = 0 : i64, tpu.core_type = #tpu.core_type<tc>, window_params = [{transform_indices = @transform_0, window_bounds = array<i64: 16, 128>}, {pipeline_mode = #tpu.pipeline_mode<synchronous>, transform_indices = @transform_1, window_bounds = array<i64: 128, 128>}, {pipeline_mode = #tpu.pipeline_mode<synchronous>, transform_indices = @transform_2, window_bounds = array<i64: 1, 128>}, {pipeline_mode = #tpu.pipeline_mode<synchronous>, transform_indices = @transform_3, window_bounds = array<i64: 2, 128, 128>}, {pipeline_mode = #tpu.pipeline_mode<synchronous>, transform_indices = @transform_4, window_bounds = array<i64: 2, 1, 128>}, {pipeline_mode = #tpu.pipeline_mode<synchronous>, transform_indices = @transform_5, window_bounds = array<i64: 128, 128>}, {pipeline_mode = #tpu.pipeline_mode<synchronous>, transform_indices = @transform_6, window_bounds = array<i64: 1, 128>}, {transform_indices = @transform_7, window_bounds = array<i64: 16, 128>}]} {
    %c0 = arith.constant 0 : index
    %c0_0 = arith.constant 0 : index
    %0 = vector.load %arg1[%c0, %c0_0] : memref<16x128xbf16, #tpu.memory_space<vmem>>, vector<16x128xbf16>
    %c0_1 = arith.constant 0 : index
    %c0_2 = arith.constant 0 : index
    %1 = vector.load %arg2[%c0_1, %c0_2] : memref<128x128xbf16, #tpu.memory_space<vmem>>, vector<128x128xbf16>
    %cst = arith.constant dense<0.000000e+00> : vector<16x128xf32>
    %2 = tpu.matmul %0, %1, %cst {dimension_numbers = #tpu.dot_dimension_numbers<[1], [0], [0], [1], [0, 0, 1, 1], [], []>} : vector<16x128xbf16>, vector<128x128xbf16>, vector<16x128xf32> -> vector<16x128xf32>
    %c0_3 = arith.constant 0 : index
    %c0_4 = arith.constant 0 : index
    %3 = vector.load %arg3[%c0_3, %c0_4] : memref<1x128xf32, #tpu.memory_space<vmem>>, vector<1x128xf32>
    %4 = vector.broadcast %3 : vector<1x128xf32> to vector<16x128xf32>
    %5 = arith.addf %2, %4 : vector<16x128xf32>
    %cst_5 = arith.constant 0.000000e+00 : f32
    %6 = vector.broadcast %cst_5 : f32 to vector<16x128xf32>
    %7 = arith.maximumf %5, %6 : vector<16x128xf32>
    %8 = arith.truncf %7 : vector<16x128xf32> to vector<16x128xbf16>
    %c0_6 = arith.constant 0 : index
    %c0_7 = arith.constant 0 : index
    %c0_8 = arith.constant 0 : index
    %9 = vector.load %arg4[%c0_6, %c0_7, %c0_8] : memref<2x128x128xbf16, #tpu.memory_space<vmem>>, vector<1x128x128xbf16>
    %10 = vector.shape_cast %9 : vector<1x128x128xbf16> to vector<128x128xbf16>
    %cst_9 = arith.constant dense<0.000000e+00> : vector<16x128xf32>
    %11 = tpu.matmul %8, %10, %cst_9 {dimension_numbers = #tpu.dot_dimension_numbers<[1], [0], [0], [1], [0, 0, 1, 1], [], []>} : vector<16x128xbf16>, vector<128x128xbf16>, vector<16x128xf32> -> vector<16x128xf32>
    %c0_10 = arith.constant 0 : index
    %c0_11 = arith.constant 0 : index
    %c0_12 = arith.constant 0 : index
    %12 = vector.load %arg5[%c0_10, %c0_11, %c0_12] : memref<2x1x128xf32, #tpu.memory_space<vmem>>, vector<1x1x128xf32>
    %13 = vector.shape_cast %12 : vector<1x1x128xf32> to vector<1x128xf32>
    %14 = vector.broadcast %13 : vector<1x128xf32> to vector<16x128xf32>
    %15 = arith.addf %11, %14 : vector<16x128xf32>
    %cst_13 = arith.constant 0.000000e+00 : f32
    %16 = vector.broadcast %cst_13 : f32 to vector<16x128xf32>
    %17 = arith.maximumf %15, %16 : vector<16x128xf32>
    %18 = arith.truncf %17 : vector<16x128xf32> to vector<16x128xbf16>
    %c1 = arith.constant 1 : index
    %c0_14 = arith.constant 0 : index
    %c0_15 = arith.constant 0 : index
    %19 = vector.load %arg4[%c1, %c0_14, %c0_15] : memref<2x128x128xbf16, #tpu.memory_space<vmem>>, vector<1x128x128xbf16>
    %20 = vector.shape_cast %19 : vector<1x128x128xbf16> to vector<128x128xbf16>
    %cst_16 = arith.constant dense<0.000000e+00> : vector<16x128xf32>
    %21 = tpu.matmul %18, %20, %cst_16 {dimension_numbers = #tpu.dot_dimension_numbers<[1], [0], [0], [1], [0, 0, 1, 1], [], []>} : vector<16x128xbf16>, vector<128x128xbf16>, vector<16x128xf32> -> vector<16x128xf32>
    %c1_17 = arith.constant 1 : index
    %c0_18 = arith.constant 0 : index
    %c0_19 = arith.constant 0 : index
    %22 = vector.load %arg5[%c1_17, %c0_18, %c0_19] : memref<2x1x128xf32, #tpu.memory_space<vmem>>, vector<1x1x128xf32>
    %23 = vector.shape_cast %22 : vector<1x1x128xf32> to vector<1x128xf32>
    %24 = vector.broadcast %23 : vector<1x128xf32> to vector<16x128xf32>
    %25 = arith.addf %21, %24 : vector<16x128xf32>
    %cst_20 = arith.constant 0.000000e+00 : f32
    %26 = vector.broadcast %cst_20 : f32 to vector<16x128xf32>
    %27 = arith.maximumf %25, %26 : vector<16x128xf32>
    %28 = arith.truncf %27 : vector<16x128xf32> to vector<16x128xbf16>
    %c0_21 = arith.constant 0 : index
    %c0_22 = arith.constant 0 : index
    %29 = vector.load %arg6[%c0_21, %c0_22] : memref<128x128xbf16, #tpu.memory_space<vmem>>, vector<128x128xbf16>
    %cst_23 = arith.constant dense<0.000000e+00> : vector<16x128xf32>
    %30 = tpu.matmul %28, %29, %cst_23 {dimension_numbers = #tpu.dot_dimension_numbers<[1], [0], [0], [1], [0, 0, 1, 1], [], []>} : vector<16x128xbf16>, vector<128x128xbf16>, vector<16x128xf32> -> vector<16x128xf32>
    %c0_24 = arith.constant 0 : index
    %c0_25 = arith.constant 0 : index
    %31 = vector.load %arg7[%c0_24, %c0_25] : memref<1x128xf32, #tpu.memory_space<vmem>>, vector<1x128xf32>
    %32 = vector.broadcast %31 : vector<1x128xf32> to vector<16x128xf32>
    %33 = arith.addf %30, %32 : vector<16x128xf32>
    %34 = tpu.iota {dimensions = array<i32: 1>} : vector<16x128xi32>
    %c16_i32 = arith.constant 16 : i32
    %35 = vector.broadcast %c16_i32 : i32 to vector<16x128xi32>
    %36 = arith.cmpi slt, %34, %35 : vector<16x128xi32>
    %cst_26 = arith.constant -1.000000e+30 : f32
    %37 = vector.broadcast %cst_26 : f32 to vector<16x128xf32>
    %38 = arith.select %36, %33, %37 : vector<16x128xi1>, vector<16x128xf32>
    %cst_27 = arith.constant dense<0xFF800000> : vector<16xf32>
    %39 = vector.multi_reduction <maximumf>, %38, %cst_27 [1] : vector<16x128xf32> to vector<16xf32>
    %40 = vector.shape_cast %39 : vector<16xf32> to vector<16x1xf32>
    %41 = vector.broadcast %40 : vector<16x1xf32> to vector<16x128xf32>
    %42 = arith.subf %38, %41 : vector<16x128xf32>
    %43 = math.exp %42 : vector<16x128xf32>
    %cst_28 = arith.constant dense<0.000000e+00> : vector<16xf32>
    %44 = vector.multi_reduction <add>, %43, %cst_28 [1] : vector<16x128xf32> to vector<16xf32>
    %45 = vector.shape_cast %44 : vector<16xf32> to vector<16x1xf32>
    %46 = vector.broadcast %45 : vector<16x1xf32> to vector<16x128xf32>
    %47 = arith.divf %43, %46 : vector<16x128xf32>
    %c0_29 = arith.constant 0 : index
    %c0_30 = arith.constant 0 : index
    %48 = vector.load %arg8[%c0_29, %c0_30] : memref<16x128xf32, #tpu.memory_space<vmem>>, vector<16x128xf32>
    tpu.vector_store %arg8[%c0_29, %c0_30], %47 {strides = array<i32>} : memref<16x128xf32, #tpu.memory_space<vmem>>, vector<16x128xf32>,
    return
  }
  func.func @transform_0(%arg0: i32) -> (i32, i32) {
    %c0_i32 = arith.constant 0 : i32
    %c0_i32_0 = arith.constant 0 : i32
    return %arg0, %c0_i32 : i32, i32
  }
  func.func @transform_1(%arg0: i32) -> (i32, i32) {
    %c0_i32 = arith.constant 0 : i32
    %c0_i32_0 = arith.constant 0 : i32
    %c0_i32_1 = arith.constant 0 : i32
    return %c0_i32, %c0_i32_0 : i32, i32
  }
  func.func @transform_2(%arg0: i32) -> (i32, i32) {
    %c0_i32 = arith.constant 0 : i32
    %c0_i32_0 = arith.constant 0 : i32
    %c0_i32_1 = arith.constant 0 : i32
    return %c0_i32, %c0_i32_0 : i32, i32
  }
  func.func @transform_3(%arg0: i32) -> (i32, i32, i32) {
    %c0_i32 = arith.constant 0 : i32
    %c0_i32_0 = arith.constant 0 : i32
    %c0_i32_1 = arith.constant 0 : i32
    %c0_i32_2 = arith.constant 0 : i32
    return %c0_i32, %c0_i32_0, %c0_i32_1 : i32, i32, i32
  }
  func.func @transform_4(%arg0: i32) -> (i32, i32, i32) {
    %c0_i32 = arith.constant 0 : i32
    %c0_i32_0 = arith.constant 0 : i32
    %c0_i32_1 = arith.constant 0 : i32
    %c0_i32_2 = arith.constant 0 : i32
    return %c0_i32, %c0_i32_0, %c0_i32_1 : i32, i32, i32
  }
  func.func @transform_5(%arg0: i32) -> (i32, i32) {
    %c0_i32 = arith.constant 0 : i32
    %c0_i32_0 = arith.constant 0 : i32
    %c0_i32_1 = arith.constant 0 : i32
    return %c0_i32, %c0_i32_0 : i32, i32
  }
  func.func @transform_6(%arg0: i32) -> (i32, i32) {
    %c0_i32 = arith.constant 0 : i32
    %c0_i32_0 = arith.constant 0 : i32
    %c0_i32_1 = arith.constant 0 : i32
    return %c0_i32, %c0_i32_0 : i32, i32
  }
  func.func @transform_7(%arg0: i32) -> (i32, i32) {
    %c0_i32 = arith.constant 0 : i32
    %c0_i32_0 = arith.constant 0 : i32
    return %arg0, %c0_i32 : i32, i32
  }
}

module attributes {stable_mosaic.version = 11 : i64} {
  func.func @kernel(%arg0: i32, %arg1: memref<16x128xbf16, #tpu.memory_space<vmem>>, %arg2: memref<128x128xbf16, #tpu.memory_space<vmem>>, %arg3: memref<1x128xf32, #tpu.memory_space<vmem>>, %arg4: memref<2x128x128xbf16, #tpu.memory_space<vmem>>, %arg5: memref<2x1x128xf32, #tpu.memory_space<vmem>>, %arg6: memref<128x128xbf16, #tpu.memory_space<vmem>>, %arg7: memref<1x128xf32, #tpu.memory_space<vmem>>, %arg8: memref<16x128xf32, #tpu.memory_space<vmem>>) attributes {dimension_semantics = [#tpu.dimension_semantics<parallel>], iteration_bounds = array<i64: 1>, scalar_prefetch = 0 : i64, scratch_operands = 0 : i64, tpu.core_type = #tpu.core_type<tc>, window_params = [{transform_indices = @transform_0, window_bounds = array<i64: 16, 128>}, {pipeline_mode = #tpu.pipeline_mode<synchronous>, transform_indices = @transform_1, window_bounds = array<i64: 128, 128>}, {pipeline_mode = #tpu.pipeline_mode<synchronous>, transform_indices = @transform_2, window_bounds = array<i64: 1, 128>}, {pipeline_mode = #tpu.pipeline_mode<synchronous>, transform_indices = @transform_3, window_bounds = array<i64: 2, 128, 128>}, {pipeline_mode = #tpu.pipeline_mode<synchronous>, transform_indices = @transform_4, window_bounds = array<i64: 2, 1, 128>}, {pipeline_mode = #tpu.pipeline_mode<synchronous>, transform_indices = @transform_5, window_bounds = array<i64: 128, 128>}, {pipeline_mode = #tpu.pipeline_mode<synchronous>, transform_indices = @transform_6, window_bounds = array<i64: 1, 128>}, {transform_indices = @transform_7, window_bounds = array<i64: 16, 128>}]} {
    %c0 = arith.constant 0 : index
    %c0_0 = arith.constant 0 : index
    %0 = vector.load %arg1[%c0, %c0_0] : memref<16x128xbf16, #tpu.memory_space<vmem>>, vector<16x128xbf16>
    %c0_1 = arith.constant 0 : index
    %c0_2 = arith.constant 0 : index
    %1 = vector.load %arg2[%c0_1, %c0_2] : memref<128x128xbf16, #tpu.memory_space<vmem>>, vector<128x128xbf16>
    %cst = arith.constant dense<0.000000e+00> : vector<16x128xf32>
    %2 = tpu.matmul %0, %1, %cst {dimension_numbers = #tpu.dot_dimension_numbers<[1], [0], [0], [1], [0, 0, 1, 1], [], []>} : vector<16x128xbf16>, vector<128x128xbf16>, vector<16x128xf32> -> vector<16x128xf32>
    %c0_3 = arith.constant 0 : index
    %c0_4 = arith.constant 0 : index
    %3 = vector.load %arg3[%c0_3, %c0_4] : memref<1x128xf32, #tpu.memory_space<vmem>>, vector<1x128xf32>
    %4 = vector.broadcast %3 : vector<1x128xf32> to vector<16x128xf32>
    %5 = arith.addf %2, %4 : vector<16x128xf32>
    %cst_5 = arith.constant 0.000000e+00 : f32
    %6 = vector.broadcast %cst_5 : f32 to vector<16x128xf32>
    %7 = arith.maximumf %5, %6 : vector<16x128xf32>
    %8 = arith.truncf %7 : vector<16x128xf32> to vector<16x128xbf16>
    %c0_6 = arith.constant 0 : index
    %c0_7 = arith.constant 0 : index
    %c0_8 = arith.constant 0 : index
    %9 = vector.load %arg4[%c0_6, %c0_7, %c0_8] : memref<2x128x128xbf16, #tpu.memory_space<vmem>>, vector<1x128x128xbf16>
    %10 = vector.shape_cast %9 : vector<1x128x128xbf16> to vector<128x128xbf16>
    %cst_9 = arith.constant dense<0.000000e+00> : vector<16x128xf32>
    %11 = tpu.matmul %8, %10, %cst_9 {dimension_numbers = #tpu.dot_dimension_numbers<[1], [0], [0], [1], [0, 0, 1, 1], [], []>} : vector<16x128xbf16>, vector<128x128xbf16>, vector<16x128xf32> -> vector<16x128xf32>
    %c0_10 = arith.constant 0 : index
    %c0_11 = arith.constant 0 : index
    %c0_12 = arith.constant 0 : index
    %12 = vector.load %arg5[%c0_10, %c0_11, %c0_12] : memref<2x1x128xf32, #tpu.memory_space<vmem>>, vector<1x1x128xf32>
    %13 = vector.shape_cast %12 : vector<1x1x128xf32> to vector<1x128xf32>
    %14 = vector.broadcast %13 : vector<1x128xf32> to vector<16x128xf32>
    %15 = arith.addf %11, %14 : vector<16x128xf32>
    %cst_13 = arith.constant 0.000000e+00 : f32
    %16 = vector.broadcast %cst_13 : f32 to vector<16x128xf32>
    %17 = arith.maximumf %15, %16 : vector<16x128xf32>
    %18 = arith.truncf %17 : vector<16x128xf32> to vector<16x128xbf16>
    %c1 = arith.constant 1 : index
    %c0_14 = arith.constant 0 : index
    %c0_15 = arith.constant 0 : index
    %19 = vector.load %arg4[%c1, %c0_14, %c0_15] : memref<2x128x128xbf16, #tpu.memory_space<vmem>>, vector<1x128x128xbf16>
    %20 = vector.shape_cast %19 : vector<1x128x128xbf16> to vector<128x128xbf16>
    %cst_16 = arith.constant dense<0.000000e+00> : vector<16x128xf32>
    %21 = tpu.matmul %18, %20, %cst_16 {dimension_numbers = #tpu.dot_dimension_numbers<[1], [0], [0], [1], [0, 0, 1, 1], [], []>} : vector<16x128xbf16>, vector<128x128xbf16>, vector<16x128xf32> -> vector<16x128xf32>
    %c1_17 = arith.constant 1 : index
    %c0_18 = arith.constant 0 : index
    %c0_19 = arith.constant 0 : index
    %22 = vector.load %arg5[%c1_17, %c0_18, %c0_19] : memref<2x1x128xf32, #tpu.memory_space<vmem>>, vector<1x1x128xf32>
    %23 = vector.shape_cast %22 : vector<1x1x128xf32> to vector<1x128xf32>
    %24 = vector.broadcast %23 : vector<1x128xf32> to vector<16x128xf32>
    %25 = arith.addf %21, %24 : vector<16x128xf32>
    %cst_20 = arith.constant 0.000000e+00 : f32
    %26 = vector.broadcast %cst_20 : f32 to vector<16x128xf32>
    %27 = arith.maximumf %25, %26 : vector<16x128xf32>
    %28 = arith.truncf %27 : vector<16x128xf32> to vector<16x128xbf16>
    %c0_21 = arith.constant 0 : index
    %c0_22 = arith.constant 0 : index
    %29 = vector.load %arg6[%c0_21, %c0_22] : memref<128x128xbf16, #tpu.memory_space<vmem>>, vector<128x128xbf16>
    %cst_23 = arith.constant dense<0.000000e+00> : vector<16x128xf32>
    %30 = tpu.matmul %28, %29, %cst_23 {dimension_numbers = #tpu.dot_dimension_numbers<[1], [0], [0], [1], [0, 0, 1, 1], [], []>} : vector<16x128xbf16>, vector<128x128xbf16>, vector<16x128xf32> -> vector<16x128xf32>
    %c0_24 = arith.constant 0 : index
    %c0_25 = arith.constant 0 : index
    %31 = vector.load %arg7[%c0_24, %c0_25] : memref<1x128xf32, #tpu.memory_space<vmem>>, vector<1x128xf32>
    %32 = vector.broadcast %31 : vector<1x128xf32> to vector<16x128xf32>
    %33 = arith.addf %30, %32 : vector<16x128xf32>
    %34 = tpu.iota {dimensions = array<i32: 1>} : vector<16x128xi32>
    %c16_i32 = arith.constant 16 : i32
    %35 = vector.broadcast %c16_i32 : i32 to vector<16x128xi32>
    %36 = arith.cmpi slt, %34, %35 : vector<16x128xi32>
    %cst_26 = arith.constant -1.000000e+30 : f32
    %37 = vector.broadcast %cst_26 : f32 to vector<16x128xf32>
    %38 = arith.select %36, %33, %37 : vector<16x128xi1>, vector<16x128xf32>
    %cst_27 = arith.constant dense<0xFF800000> : vector<16xf32>
    %39 = vector.multi_reduction <maximumf>, %38, %cst_27 [1] : vector<16x128xf32> to vector<16xf32>
    %40 = vector.shape_cast %39 : vector<16xf32> to vector<16x1xf32>
    %41 = vector.broadcast %40 : vector<16x1xf32> to vector<16x128xf32>
    %42 = arith.subf %38, %41 : vector<16x128xf32>
    %43 = math.exp %42 : vector<16x128xf32>
    %cst_28 = arith.constant dense<0.000000e+00> : vector<16xf32>
    %44 = vector.multi_reduction <add>, %43, %cst_28 [1] : vector<16x128xf32> to vector<16xf32>
    %45 = vector.shape_cast %44 : vector<16xf32> to vector<16x1xf32>
    %46 = vector.broadcast %45 : vector<16x1xf32> to vector<16x128xf32>
    %47 = arith.divf %43, %46 : vector<16x128xf32>
    %c0_29 = arith.constant 0 : index
    %c0_30 = arith.constant 0 : index
    %48 = vector.load %arg8[%c0_29, %c0_30] : memref<16x128xf32, #tpu.memory_space<vmem>>, vector<16x128xf32>
    tpu.vector_store %arg8[%c0_29, %c0_30], %47 {strides = array<i32>} : memref<16x128xf32, #tpu.memory_space<vmem>>, vector<16x128xf32>,
    return
  }
  func.func @transform_0(%arg0: i32) -> (i32, i32) {
    %c0_i32 = arith.constant 0 : i32
    %c0_i32_0 = arith.constant 0 : i32
    return %arg0, %c0_i32 : i32, i32
  }
  func.func @transform_1(%arg0: i32) -> (i32, i32) {
    %c0_i32 = arith.constant 0 : i32
    %c0_i32_0 = arith.constant 0 : i32
    %c0_i32_1 = arith.constant 0 : i32
    return %c0_i32, %c0_i32_0 : i32, i32
  }
  func.func @transform_2(%arg0: i32) -> (i32, i32) {
    %c0_i32 = arith.constant 0 : i32
    %c0_i32_0 = arith.constant 0 : i32
    %c0_i32_1 = arith.constant 0 : i32
    return %c0_i32, %c0_i32_0 : i32, i32
  }
  func.func @transform_3(%arg0: i32) -> (i32, i32, i32) {
    %c0_i32 = arith.constant 0 : i32
    %c0_i32_0 = arith.constant 0 : i32
    %c0_i32_1 = arith.constant 0 : i32
    %c0_i32_2 = arith.constant 0 : i32
    return %c0_i32, %c0_i32_0, %c0_i32_1 : i32, i32, i32
  }
  func.func @transform_4(%arg0: i32) -> (i32, i32, i32) {
    %c0_i32 = arith.constant 0 : i32
    %c0_i32_0 = arith.constant 0 : i32
    %c0_i32_1 = arith.constant 0 : i32
    %c0_i32_2 = arith.constant 0 : i32
    return %c0_i32, %c0_i32_0, %c0_i32_1 : i32, i32, i32
  }
  func.func @transform_5(%arg0: i32) -> (i32, i32) {
    %c0_i32 = arith.constant 0 : i32
    %c0_i32_0 = arith.constant 0 : i32
    %c0_i32_1 = arith.constant 0 : i32
    return %c0_i32, %c0_i32_0 : i32, i32
  }
  func.func @transform_6(%arg0: i32) -> (i32, i32) {
    %c0_i32 = arith.constant 0 : i32
    %c0_i32_0 = arith.constant 0 : i32
    %c0_i32_1 = arith.constant 0 : i32
    return %c0_i32, %c0_i32_0 : i32, i32
  }
  func.func @transform_7(%arg0: i32) -> (i32, i32) {
    %c0_i32 = arith.constant 0 : i32
    %c0_i32_0 = arith.constant 0 : i32
    return %arg0, %c0_i32 : i32, i32
  }
}

</mosaic_0001>

<llo_original>
// kernel: tpu_custom_call.1
$region0: #{tpu_custom_call.1}
  #allocation0 [shape = 'u32[]', space=smem, size = 0x4, offset = 0x4, fixed_abs, tag = 'smem constant byte address 0x4 - core index']
  #allocation1 [shape = 'u32[144,128]{1,0:T(1,128)}', space=vmem, size = 0x12000, scoped, tag = 'internal scratch']
  %s0 = inlined_call_operand.hbm [shape: bf16[16,128], index: 0, kind: input, shape index: {}]
  %s1 = inlined_call_operand.hbm [shape: bf16[128,128], index: 1, kind: input, shape index: {}]
  %s2 = inlined_call_operand.vmem [shape: f32[1,128], index: 2, kind: input, shape index: {}]
  %s3 = inlined_call_operand.hbm [shape: bf16[2,128,128], index: 3, kind: input, shape index: {}]
  %s4 = inlined_call_operand.vmem [shape: f32[2,1,128], index: 4, kind: input, shape index: {}]
  %s5 = inlined_call_operand.hbm [shape: bf16[128,128], index: 5, kind: input, shape index: {}]
  %s6 = inlined_call_operand.vmem [shape: f32[1,128], index: 6, kind: input, shape index: {}]
  %s7 = inlined_call_operand.hbm [shape: f32[16,128], index: 7, kind: output, shape index: {}]
  %s8 = sld [smem:[#allocation0]]
  $region54: #{tpu_custom_call.1} parent=0
    _
  %s10 = ssub.s32 1, %s8
  %s11 = scalar_select 0, %s10, %s8
  $region1: #{tpu_custom_call.1} parent=0
    #allocation2 [shape = 'u8[4096]{0}', space=vmem, size = 0x1000, scoped, tag = 'input window, operand 0, single buffered']
    #allocation3 [shape = 's32[1]{0}', space=sflag, size = 0x4, scoped, tag = 'scoped memory for tpu_custom_call.1']
    #allocation4 [shape = 's32[1]{0}', space=sflag, size = 0x4, scoped, tag = 'scoped memory for tpu_custom_call.1']
    #allocation5 [shape = 'u8[32768]{0}', space=vmem, size = 0x8000, scoped, tag = 'input window, operand 1, single buffered']
    #allocation6 [shape = 's32[1]{0}', space=sflag, size = 0x4, scoped, tag = 'scoped memory for tpu_custom_call.1']
    #allocation7 [shape = 'u8[65536]{0}', space=vmem, size = 0x10000, scoped, tag = 'input window, operand 3, single buffered']
    #allocation8 [shape = 'u8[32768]{0}', space=vmem, size = 0x8000, scoped, tag = 'input window, operand 5, single buffered']
    #allocation9 [shape = 's32[1]{0}', space=sflag, size = 0x4, scoped, tag = 'scoped memory for tpu_custom_call.1']
    #allocation10 [shape = 'u8[8192]{0}', space=vmem, size = 0x2000, scoped, tag = 'output window, operand 0, single buffered']
    %12 = vsyncpa [#allocation3], 0
    %13 = vsyncpa [#allocation6], 0
    %14 = vsyncpa [#allocation9], 0
    %15 = vsyncpa [#allocation4], 0
    // Predicated region
    $region2: #{tpu_custom_call.1} parent=1 // pred_check
      _
    $region3: #{tpu_custom_call.1} parent=1 // pred_check_branch
      %17 = sbr.rel (0) target = $region5
    $region4: #{tpu_custom_call.1} parent=1 // pred_region
      %s19 = ssub.s32 128, 128
      %20 = vsyncadd [#allocation3], %s19
      %s21 = sshll.u32 [#allocation2], 4
      %s22 = int_to_ptr.vmem [resolvable:$true] %s21
      %27 = dma.hbm_to_vmem [thread:$0]  %s0, 128, %s22, [#allocation3], 64, 64, 4
    $region5: #{tpu_custom_call.1} parent=1 // pred_fallthru
      _
    // Predicated region
    $region6: #{tpu_custom_call.1} parent=1 // pred_check
      _
    $region7: #{tpu_custom_call.1} parent=1 // pred_check_branch
      %29 = sbr.rel (0) target = $region9
    $region8: #{tpu_custom_call.1} parent=1 // pred_region
      %s31 = ssub.s32 1024, 1024
      %32 = vsyncadd [#allocation6], %s31
      %s33 = sshll.u32 [#allocation5], 4
      %s34 = int_to_ptr.vmem [resolvable:$true] %s33
      %39 = dma.hbm_to_vmem [thread:$0]  %s1, 1024, %s34, [#allocation6], 64, 64, 4
    $region9: #{tpu_custom_call.1} parent=1 // pred_fallthru
      _
    // Predicated region
    $region10: #{tpu_custom_call.1} parent=1 // pred_check
      _
    $region11: #{tpu_custom_call.1} parent=1 // pred_check_branch
      %41 = sbr.rel (0) target = $region13
    $region12: #{tpu_custom_call.1} parent=1 // pred_region
      _
    $region13: #{tpu_custom_call.1} parent=1 // pred_fallthru
      _
    // Predicated region
    $region14: #{tpu_custom_call.1} parent=1 // pred_check
      _
    $region15: #{tpu_custom_call.1} parent=1 // pred_check_branch
      %43 = sbr.rel (0) target = $region17
    $region16: #{tpu_custom_call.1} parent=1 // pred_region
      %s45 = ssub.s32 2048, 2048
      %46 = vsyncadd [#allocation6], %s45
      %s47 = sshll.u32 [#allocation7], 4
      %s48 = int_to_ptr.vmem [resolvable:$true] %s47
      %53 = dma.hbm_to_vmem [thread:$0]  %s3, 2048, %s48, [#allocation6], 64, 64, 4
    $region17: #{tpu_custom_call.1} parent=1 // pred_fallthru
      _
    // Predicated region
    $region18: #{tpu_custom_call.1} parent=1 // pred_check
      _
    $region19: #{tpu_custom_call.1} parent=1 // pred_check_branch
      %55 = sbr.rel (0) target = $region21
    $region20: #{tpu_custom_call.1} parent=1 // pred_region
      _
    $region21: #{tpu_custom_call.1} parent=1 // pred_fallthru
      _
    // Predicated region
    $region22: #{tpu_custom_call.1} parent=1 // pred_check
      _
    $region23: #{tpu_custom_call.1} parent=1 // pred_check_branch
      %57 = sbr.rel (0) target = $region25
    $region24: #{tpu_custom_call.1} parent=1 // pred_region
      %s59 = ssub.s32 1024, 1024
      %60 = vsyncadd [#allocation9], %s59
      %s61 = sshll.u32 [#allocation8], 4
      %s62 = int_to_ptr.vmem [resolvable:$true] %s61
      %67 = dma.hbm_to_vmem [thread:$0]  %s5, 1024, %s62, [#allocation9], 64, 64, 4
    $region25: #{tpu_custom_call.1} parent=1 // pred_fallthru
      _
    // Predicated region
    $region26: #{tpu_custom_call.1} parent=1 // pred_check
      _
    $region27: #{tpu_custom_call.1} parent=1 // pred_check_branch
      %69 = sbr.rel (0) target = $region29
    $region28: #{tpu_custom_call.1} parent=1 // pred_region
      _
    $region29: #{tpu_custom_call.1} parent=1 // pred_fallthru
      _
    // Predicated region
    $region30: #{tpu_custom_call.1} parent=1 // pred_check
      _
    $region31: #{tpu_custom_call.1} parent=1 // pred_check_branch
      %71 = sbr.rel (0) target = $region33
    $region32: #{tpu_custom_call.1} parent=1 // pred_region
      %72 = dma.done [#allocation3], 128
    $region33: #{tpu_custom_call.1} parent=1 // pred_fallthru
      _
    // Predicated region
    $region34: #{tpu_custom_call.1} parent=1 // pred_check
      _
    $region35: #{tpu_custom_call.1} parent=1 // pred_check_branch
      %74 = sbr.rel (0) target = $region37
    $region36: #{tpu_custom_call.1} parent=1 // pred_region
      %75 = dma.done [#allocation6], 1024
    $region37: #{tpu_custom_call.1} parent=1 // pred_fallthru
      _
    // Predicated region
    $region38: #{tpu_custom_call.1} parent=1 // pred_check
      _
    $region39: #{tpu_custom_call.1} parent=1 // pred_check_branch
      %77 = sbr.rel (0) target = $region41
    $region40: #{tpu_custom_call.1} parent=1 // pred_region
      %78 = dma.done [#allocation6], 2048
    $region41: #{tpu_custom_call.1} parent=1 // pred_fallthru
      _
    // Predicated region
    $region42: #{tpu_custom_call.1} parent=1 // pred_check
      _
    $region43: #{tpu_custom_call.1} parent=1 // pred_check_branch
      %80 = sbr.rel (0) target = $region45
    $region44: #{tpu_custom_call.1} parent=1 // pred_region
      %81 = dma.done [#allocation9], 1024
    $region45: #{tpu_custom_call.1} parent=1 // pred_fallthru
      _
    %v83 = vld [vmem:[#allocation2] sm:$0xf]
    %v84 = vld [vmem:[#allocation2 + $0x4] sm:$0xf]
    %v85 = vld [vmem:[#allocation5] sm:$0xf]
    %v86 = vld [vmem:[#allocation5 + $0x4] sm:$0xf]
    %v87 = vld [vmem:[#allocation5 + $0x8] sm:$0xf]
    %v88 = vld [vmem:[#allocation5 + $0xc] sm:$0xf]
    %v89 = vld [vmem:[#allocation5 + $0x10] sm:$0xf]
    %v90 = vld [vmem:[#allocation5 + $0x14] sm:$0xf]
    %v91 = vld [vmem:[#allocation5 + $0x18] sm:$0xf]
    %v92 = vld [vmem:[#allocation5 + $0x1c] sm:$0xf]
    %v93 = vld [vmem:[#allocation5 + $0x20] sm:$0xf]
    %v94 = vld [vmem:[#allocation5 + $0x24] sm:$0xf]
    %v95 = vld [vmem:[#allocation5 + $0x28] sm:$0xf]
    %v96 = vld [vmem:[#allocation5 + $0x2c] sm:$0xf]
    %v97 = vld [vmem:[#allocation5 + $0x30] sm:$0xf]
    %v98 = vld [vmem:[#allocation5 + $0x34] sm:$0xf]
    %v99 = vld [vmem:[#allocation5 + $0x38] sm:$0xf]
    %v100 = vld [vmem:[#allocation5 + $0x3c] sm:$0xf]
    %v101 = vld [vmem:[%s2] sm:$0x1]
    %v103 = vlaneseq
    %v104 = vshrl.u32 %v103, 7
    %v105 = vsub.s32 0, %v104
    %v106 = vrot.slane %v101, %v105
    %v110 = vunpack.c.l.b16 %v83
    %v111 = vunpack.c.l.b16 %v84
    %v112 = vpack.c.b16 %v111, %v110
    %v130 = vunpack.c.l.b16 %v85
    %v131 = vunpack.c.l.b16 %v86
    %v132 = vunpack.c.l.b16 %v87
    %v133 = vunpack.c.l.b16 %v88
    %v134 = vunpack.c.l.b16 %v89
    %v135 = vunpack.c.l.b16 %v90
    %v136 = vunpack.c.l.b16 %v91
    %v137 = vunpack.c.l.b16 %v92
    %v138 = vunpack.c.l.b16 %v93
    %v139 = vunpack.c.l.b16 %v94
    %v140 = vunpack.c.l.b16 %v95
    %v141 = vunpack.c.l.b16 %v96
    %v142 = vunpack.c.l.b16 %v97
    %v143 = vunpack.c.l.b16 %v98
    %v144 = vunpack.c.l.b16 %v99
    %v145 = vunpack.c.l.b16 %v100
    %v146 = vpack.c.b16 %v131, %v130
    %v147 = vpack.c.b16 %v133, %v132
    %v148 = vpack.c.b16 %v135, %v134
    %v149 = vpack.c.b16 %v137, %v136
    %v150 = vpack.c.b16 %v139, %v138
    %v151 = vpack.c.b16 %v141, %v140
    %v152 = vpack.c.b16 %v143, %v142
    %v153 = vpack.c.b16 %v145, %v144
    %162 = vmatprep.subr.bf16.mxu0 0
    %163 = vmatpush1.bf16.msra.mxu0 %v153
    %164 = vmatprep.subr.bf16.mxu0 0
    %165 = vmatpush1.bf16.msra.mxu0 %v152
    %166 = vmatprep.subr.bf16.mxu0 0
    %167 = vmatpush1.bf16.msra.mxu0 %v151
    %168 = vmatprep.subr.bf16.mxu0 0
    %169 = vmatpush1.bf16.msra.mxu0 %v150
    %170 = vmatprep.subr.bf16.mxu0 0
    %171 = vmatpush1.bf16.msra.mxu0 %v149
    %172 = vmatprep.subr.bf16.mxu0 0
    %173 = vmatpush1.bf16.msra.mxu0 %v148
    %174 = vmatprep.subr.bf16.mxu0 0
    %175 = vmatpush1.bf16.msra.mxu0 %v147
    %176 = vmatprep.subr.bf16.mxu0 0
    %177 = vmatpush1.bf16.msra.mxu0 %v146
    %178 = vmatprep.subr.bf16.mxu0 0
    %179 = vmatpush2.bf16.msra.mxu0 0
    %180 = vmatprep.subr.bf16.mxu0 0
    %181 = vmatpush2.bf16.msra.mxu0 0
    %182 = vmatprep.subr.bf16.mxu0 0
    %183 = vmatpush2.bf16.msra.mxu0 0
    %184 = vmatprep.subr.bf16.mxu0 0
    %185 = vmatpush2.bf16.msra.mxu0 0
    %186 = vmatprep.subr.bf16.mxu0 0
    %187 = vmatpush2.bf16.msra.mxu0 0
    %188 = vmatprep.subr.bf16.mxu0 0
    %189 = vmatpush2.bf16.msra.mxu0 0
    %190 = vmatprep.subr.bf16.mxu0 0
    %191 = vmatpush2.bf16.msra.mxu0 0
    %192 = vmatprep.subr.bf16.mxu0 0
    %193 = vmatpush2.bf16.msra.mxu0 0
    %194 = vmatprep.mubr.bf16.mxu0 0
    %195 = vmatmul.mubr.bf16.gmra.mxu0 %v112
    %v196 = vpop.f32.mrf.mxu0
    %v197 = vadd.f32 %v106, %v196
    %v198 = vpop.f32.mrf.mxu0
    %v199 = vpop.f32.mrf.mxu0
    %v200 = vadd.f32 %v106, %v199
    %v201 = vpop.f32.mrf.mxu0
    %202 = vdwg.mxu0
    %v203 = vmax.f32 %v197, 0.0
    %v204 = vmax.f32 %v200, 0.0
    %v205 = vpack.c.bf16 %v204, %v203
    %v206 = vld [vmem:[#allocation7] sm:$0xf]
    %v207 = vld [vmem:[#allocation7 + $0x4] sm:$0xf]
    %v208 = vld [vmem:[#allocation7 + $0x8] sm:$0xf]
    %v209 = vld [vmem:[#allocation7 + $0xc] sm:$0xf]
    %v210 = vld [vmem:[#allocation7 + $0x10] sm:$0xf]
    %v211 = vld [vmem:[#allocation7 + $0x14] sm:$0xf]
    %v212 = vld [vmem:[#allocation7 + $0x18] sm:$0xf]
    %v213 = vld [vmem:[#allocation7 + $0x1c] sm:$0xf]
    %v214 = vld [vmem:[#allocation7 + $0x20] sm:$0xf]
    %v215 = vld [vmem:[#allocation7 + $0x24] sm:$0xf]
    %v216 = vld [vmem:[#allocation7 + $0x28] sm:$0xf]
    %v217 = vld [vmem:[#allocation7 + $0x2c] sm:$0xf]
    %v218 = vld [vmem:[#allocation7 + $0x30] sm:$0xf]
    %v219 = vld [vmem:[#allocation7 + $0x34] sm:$0xf]
    %v220 = vld [vmem:[#allocation7 + $0x38] sm:$0xf]
    %v221 = vld [vmem:[#allocation7 + $0x3c] sm:$0xf]
    %v222 = vld [vmem:[%s4] sm:$0x1]
    %v224 = vlaneseq
    %v225 = vshrl.u32 %v224, 7
    %v226 = vsub.s32 0, %v225
    %v227 = vrot.slane %v222, %v226
    %v245 = vunpack.c.l.b16 %v206
    %v246 = vunpack.c.l.b16 %v207
    %v247 = vunpack.c.l.b16 %v208
    %v248 = vunpack.c.l.b16 %v209
    %v249 = vunpack.c.l.b16 %v210
    %v250 = vunpack.c.l.b16 %v211
    %v251 = vunpack.c.l.b16 %v212
    %v252 = vunpack.c.l.b16 %v213
    %v253 = vunpack.c.l.b16 %v214
    %v254 = vunpack.c.l.b16 %v215
    %v255 = vunpack.c.l.b16 %v216
    %v256 = vunpack.c.l.b16 %v217
    %v257 = vunpack.c.l.b16 %v218
    %v258 = vunpack.c.l.b16 %v219
    %v259 = vunpack.c.l.b16 %v220
    %v260 = vunpack.c.l.b16 %v221
    %v261 = vpack.c.b16 %v246, %v245
    %v262 = vpack.c.b16 %v248, %v247
    %v263 = vpack.c.b16 %v250, %v249
    %v264 = vpack.c.b16 %v252, %v251
    %v265 = vpack.c.b16 %v254, %v253
    %v266 = vpack.c.b16 %v256, %v255
    %v267 = vpack.c.b16 %v258, %v257
    %v268 = vpack.c.b16 %v260, %v259
    %277 = vmatprep.subr.bf16.mxu0 0
    %278 = vmatpush1.bf16.msra.mxu0 %v268
    %279 = vmatprep.subr.bf16.mxu0 0
    %280 = vmatpush1.bf16.msra.mxu0 %v267
    %281 = vmatprep.subr.bf16.mxu0 0
    %282 = vmatpush1.bf16.msra.mxu0 %v266
    %283 = vmatprep.subr.bf16.mxu0 0
    %284 = vmatpush1.bf16.msra.mxu0 %v265
    %285 = vmatprep.subr.bf16.mxu0 0
    %286 = vmatpush1.bf16.msra.mxu0 %v264
    %287 = vmatprep.subr.bf16.mxu0 0
    %288 = vmatpush1.bf16.msra.mxu0 %v263
    %289 = vmatprep.subr.bf16.mxu0 0
    %290 = vmatpush1.bf16.msra.mxu0 %v262
    %291 = vmatprep.subr.bf16.mxu0 0
    %292 = vmatpush1.bf16.msra.mxu0 %v261
    %293 = vmatprep.subr.bf16.mxu0 0
    %294 = vmatpush2.bf16.msra.mxu0 0
    %295 = vmatprep.subr.bf16.mxu0 0
    %296 = vmatpush2.bf16.msra.mxu0 0
    %297 = vmatprep.subr.bf16.mxu0 0
    %298 = vmatpush2.bf16.msra.mxu0 0
    %299 = vmatprep.subr.bf16.mxu0 0
    %300 = vmatpush2.bf16.msra.mxu0 0
    %301 = vmatprep.subr.bf16.mxu0 0
    %302 = vmatpush2.bf16.msra.mxu0 0
    %303 = vmatprep.subr.bf16.mxu0 0
    %304 = vmatpush2.bf16.msra.mxu0 0
    %305 = vmatprep.subr.bf16.mxu0 0
    %306 = vmatpush2.bf16.msra.mxu0 0
    %307 = vmatprep.subr.bf16.mxu0 0
    %308 = vmatpush2.bf16.msra.mxu0 0
    %309 = vmatprep.mubr.bf16.mxu0 0
    %310 = vmatmul.mubr.bf16.gmra.mxu0 %v205
    %v311 = vpop.f32.mrf.mxu0
    %v312 = vadd.f32 %v227, %v311
    %v313 = vpop.f32.mrf.mxu0
    %v314 = vpop.f32.mrf.mxu0
    %v315 = vadd.f32 %v227, %v314
    %v316 = vpop.f32.mrf.mxu0
    %317 = vdwg.mxu0
    %v318 = vmax.f32 %v312, 0.0
    %v319 = vmax.f32 %v315, 0.0
    %v320 = vpack.c.bf16 %v319, %v318
    %s321 = scalar_lea.vmem [#allocation7], 64
    %v322 = vld [vmem:[%s321] sm:$0xf]
    %v323 = vld [vmem:[%s321 + $0x4] sm:$0xf]
    %v324 = vld [vmem:[%s321 + $0x8] sm:$0xf]
    %v325 = vld [vmem:[%s321 + $0xc] sm:$0xf]
    %v326 = vld [vmem:[%s321 + $0x10] sm:$0xf]
    %v327 = vld [vmem:[%s321 + $0x14] sm:$0xf]
    %v328 = vld [vmem:[%s321 + $0x18] sm:$0xf]
    %v329 = vld [vmem:[%s321 + $0x1c] sm:$0xf]
    %v330 = vld [vmem:[%s321 + $0x20] sm:$0xf]
    %v331 = vld [vmem:[%s321 + $0x24] sm:$0xf]
    %v332 = vld [vmem:[%s321 + $0x28] sm:$0xf]
    %v333 = vld [vmem:[%s321 + $0x2c] sm:$0xf]
    %v334 = vld [vmem:[%s321 + $0x30] sm:$0xf]
    %v335 = vld [vmem:[%s321 + $0x34] sm:$0xf]
    %v336 = vld [vmem:[%s321 + $0x38] sm:$0xf]
    %v337 = vld [vmem:[%s321 + $0x3c] sm:$0xf]
    %s338 = scalar_lea.vmem %s4, 1
    %v339 = vld [vmem:[%s338] sm:$0x1]
    %v341 = vlaneseq
    %v342 = vshrl.u32 %v341, 7
    %v343 = vsub.s32 0, %v342
    %v344 = vrot.slane %v339, %v343
    %v362 = vunpack.c.l.b16 %v322
    %v363 = vunpack.c.l.b16 %v323
    %v364 = vunpack.c.l.b16 %v324
    %v365 = vunpack.c.l.b16 %v325
    %v366 = vunpack.c.l.b16 %v326
    %v367 = vunpack.c.l.b16 %v327
    %v368 = vunpack.c.l.b16 %v328
    %v369 = vunpack.c.l.b16 %v329
    %v370 = vunpack.c.l.b16 %v330
    %v371 = vunpack.c.l.b16 %v331
    %v372 = vunpack.c.l.b16 %v332
    %v373 = vunpack.c.l.b16 %v333
    %v374 = vunpack.c.l.b16 %v334
    %v375 = vunpack.c.l.b16 %v335
    %v376 = vunpack.c.l.b16 %v336
    %v377 = vunpack.c.l.b16 %v337
    %v378 = vpack.c.b16 %v363, %v362
    %v379 = vpack.c.b16 %v365, %v364
    %v380 = vpack.c.b16 %v367, %v366
    %v381 = vpack.c.b16 %v369, %v368
    %v382 = vpack.c.b16 %v371, %v370
    %v383 = vpack.c.b16 %v373, %v372
    %v384 = vpack.c.b16 %v375, %v374
    %v385 = vpack.c.b16 %v377, %v376
    %394 = vmatprep.subr.bf16.mxu0 0
    %395 = vmatpush1.bf16.msra.mxu0 %v385
    %396 = vmatprep.subr.bf16.mxu0 0
    %397 = vmatpush1.bf16.msra.mxu0 %v384
    %398 = vmatprep.subr.bf16.mxu0 0
    %399 = vmatpush1.bf16.msra.mxu0 %v383
    %400 = vmatprep.subr.bf16.mxu0 0
    %401 = vmatpush1.bf16.msra.mxu0 %v382
    %402 = vmatprep.subr.bf16.mxu0 0
    %403 = vmatpush1.bf16.msra.mxu0 %v381
    %404 = vmatprep.subr.bf16.mxu0 0
    %405 = vmatpush1.bf16.msra.mxu0 %v380
    %406 = vmatprep.subr.bf16.mxu0 0
    %407 = vmatpush1.bf16.msra.mxu0 %v379
    %408 = vmatprep.subr.bf16.mxu0 0
    %409 = vmatpush1.bf16.msra.mxu0 %v378
    %410 = vmatprep.subr.bf16.mxu0 0
    %411 = vmatpush2.bf16.msra.mxu0 0
    %412 = vmatprep.subr.bf16.mxu0 0
    %413 = vmatpush2.bf16.msra.mxu0 0
    %414 = vmatprep.subr.bf16.mxu0 0
    %415 = vmatpush2.bf16.msra.mxu0 0
    %416 = vmatprep.subr.bf16.mxu0 0
    %417 = vmatpush2.bf16.msra.mxu0 0
    %418 = vmatprep.subr.bf16.mxu0 0
    %419 = vmatpush2.bf16.msra.mxu0 0
    %420 = vmatprep.subr.bf16.mxu0 0
    %421 = vmatpush2.bf16.msra.mxu0 0
    %422 = vmatprep.subr.bf16.mxu0 0
    %423 = vmatpush2.bf16.msra.mxu0 0
    %424 = vmatprep.subr.bf16.mxu0 0
    %425 = vmatpush2.bf16.msra.mxu0 0
    %426 = vmatprep.mubr.bf16.mxu0 0
    %427 = vmatmul.mubr.bf16.gmra.mxu0 %v320
    %v428 = vpop.f32.mrf.mxu0
    %v429 = vadd.f32 %v344, %v428
    %v430 = vpop.f32.mrf.mxu0
    %v431 = vpop.f32.mrf.mxu0
    %v432 = vadd.f32 %v344, %v431
    %v433 = vpop.f32.mrf.mxu0
    %434 = vdwg.mxu0
    %v435 = vmax.f32 %v429, 0.0
    %v436 = vmax.f32 %v432, 0.0
    %v437 = vpack.c.bf16 %v436, %v435
    %v438 = vld [vmem:[#allocation8] sm:$0xf]
    %v439 = vld [vmem:[#allocation8 + $0x4] sm:$0xf]
    %v440 = vld [vmem:[#allocation8 + $0x8] sm:$0xf]
    %v441 = vld [vmem:[#allocation8 + $0xc] sm:$0xf]
    %v442 = vld [vmem:[#allocation8 + $0x10] sm:$0xf]
    %v443 = vld [vmem:[#allocation8 + $0x14] sm:$0xf]
    %v444 = vld [vmem:[#allocation8 + $0x18] sm:$0xf]
    %v445 = vld [vmem:[#allocation8 + $0x1c] sm:$0xf]
    %v446 = vld [vmem:[#allocation8 + $0x20] sm:$0xf]
    %v447 = vld [vmem:[#allocation8 + $0x24] sm:$0xf]
    %v448 = vld [vmem:[#allocation8 + $0x28] sm:$0xf]
    %v449 = vld [vmem:[#allocation8 + $0x2c] sm:$0xf]
    %v450 = vld [vmem:[#allocation8 + $0x30] sm:$0xf]
    %v451 = vld [vmem:[#allocation8 + $0x34] sm:$0xf]
    %v452 = vld [vmem:[#allocation8 + $0x38] sm:$0xf]
    %v453 = vld [vmem:[#allocation8 + $0x3c] sm:$0xf]
    %v454 = vld [vmem:[%s6] sm:$0x1]
    %v456 = vlaneseq
    %v457 = vshrl.u32 %v456, 7
    %v458 = vsub.s32 0, %v457
    %v459 = vrot.slane %v454, %v458
    %v477 = vunpack.c.l.b16 %v438
    %v478 = vunpack.c.l.b16 %v439
    %v479 = vunpack.c.l.b16 %v440
    %v480 = vunpack.c.l.b16 %v441
    %v481 = vunpack.c.l.b16 %v442
    %v482 = vunpack.c.l.b16 %v443
    %v483 = vunpack.c.l.b16 %v444
    %v484 = vunpack.c.l.b16 %v445
    %v485 = vunpack.c.l.b16 %v446
    %v486 = vunpack.c.l.b16 %v447
    %v487 = vunpack.c.l.b16 %v448
    %v488 = vunpack.c.l.b16 %v449
    %v489 = vunpack.c.l.b16 %v450
    %v490 = vunpack.c.l.b16 %v451
    %v491 = vunpack.c.l.b16 %v452
    %v492 = vunpack.c.l.b16 %v453
    %v493 = vpack.c.b16 %v478, %v477
    %v494 = vpack.c.b16 %v480, %v479
    %v495 = vpack.c.b16 %v482, %v481
    %v496 = vpack.c.b16 %v484, %v483
    %v497 = vpack.c.b16 %v486, %v485
    %v498 = vpack.c.b16 %v488, %v487
    %v499 = vpack.c.b16 %v490, %v489
    %v500 = vpack.c.b16 %v492, %v491
    %509 = vmatprep.subr.bf16.mxu0 0
    %510 = vmatpush1.bf16.msra.mxu0 %v500
    %511 = vmatprep.subr.bf16.mxu0 0
    %512 = vmatpush1.bf16.msra.mxu0 %v499
    %513 = vmatprep.subr.bf16.mxu0 0
    %514 = vmatpush1.bf16.msra.mxu0 %v498
    %515 = vmatprep.subr.bf16.mxu0 0
    %516 = vmatpush1.bf16.msra.mxu0 %v497
    %517 = vmatprep.subr.bf16.mxu0 0
    %518 = vmatpush1.bf16.msra.mxu0 %v496
    %519 = vmatprep.subr.bf16.mxu0 0
    %520 = vmatpush1.bf16.msra.mxu0 %v495
    %521 = vmatprep.subr.bf16.mxu0 0
    %522 = vmatpush1.bf16.msra.mxu0 %v494
    %523 = vmatprep.subr.bf16.mxu0 0
    %524 = vmatpush1.bf16.msra.mxu0 %v493
    %525 = vmatprep.subr.bf16.mxu0 0
    %526 = vmatpush2.bf16.msra.mxu0 0
    %527 = vmatprep.subr.bf16.mxu0 0
    %528 = vmatpush2.bf16.msra.mxu0 0
    %529 = vmatprep.subr.bf16.mxu0 0
    %530 = vmatpush2.bf16.msra.mxu0 0
    %531 = vmatprep.subr.bf16.mxu0 0
    %532 = vmatpush2.bf16.msra.mxu0 0
    %533 = vmatprep.subr.bf16.mxu0 0
    %534 = vmatpush2.bf16.msra.mxu0 0
    %535 = vmatprep.subr.bf16.mxu0 0
    %536 = vmatpush2.bf16.msra.mxu0 0
    %537 = vmatprep.subr.bf16.mxu0 0
    %538 = vmatpush2.bf16.msra.mxu0 0
    %539 = vmatprep.subr.bf16.mxu0 0
    %540 = vmatpush2.bf16.msra.mxu0 0
    %541 = vmatprep.mubr.bf16.mxu0 0
    %542 = vmatmul.mubr.bf16.gmra.mxu0 %v437
    %v543 = vpop.f32.mrf.mxu0
    %v544 = vadd.f32 %v459, %v543
    %v545 = vpop.f32.mrf.mxu0
    %v546 = vpop.f32.mrf.mxu0
    %v547 = vadd.f32 %v459, %v546
    %v548 = vpop.f32.mrf.mxu0
    %549 = vdwg.mxu0
    %v550 = vlaneseq
    %v551 = vand.u32 %v550, 127
    %vm552 = vcmp.lt.s32.totalorder %v551, 16
    %v553 = vsel %vm552, %v544, -1e+30
    %v554 = vsel %vm552, %v547, -1e+30
    %555 = vmax.xlane.f32.xlu0 %v553
    %v556 = vpop.xlane.xlu0 %555
    %557 = vmax.xlane.f32.xlu0 %v554
    %v558 = vpop.xlane.xlu0 %557
    %v559 = vsub.f32 %v553, %v556
    %v560 = vsub.f32 %v554, %v558
    %v561 = vmul.f32 %v559, 1.442695
    %v562 = vpow.pop %v561
    %v563 = vmul.f32 %v560, 1.442695
    %v564 = vpow.pop %v563
    %565 = vadd.xlane.f32.xlu0 %v562
    %v566 = vpop.xlane.xlu0 %565
    %567 = vadd.xlane.f32.xlu0 %v564
    %v568 = vpop.xlane.xlu0 %567
    %v569 = vrcp.pop %v566
    %v570 = vmul.f32 %v562, %v569
    %v571 = vrcp.pop %v568
    %v572 = vmul.f32 %v564, %v571
    %573 = vst [vmem:[#allocation10] sm:$0xff] %v570
    %574 = vst [vmem:[#allocation10 + $0x8] sm:$0xff] %v572
    // Predicated region
    $region46: #{tpu_custom_call.1} parent=1 // pred_check
      _
    $region47: #{tpu_custom_call.1} parent=1 // pred_check_branch
      %576 = sbr.rel (0) target = $region49
    $region48: #{tpu_custom_call.1} parent=1 // pred_region
      %s578 = ssub.s32 256, 256
      %579 = vsyncadd [#allocation4], %s578
      %s580 = sshll.u32 [#allocation10], 4
      %s581 = int_to_ptr.vmem [resolvable:$true] %s580
      %586 = dma.vmem_to_hbm [thread:$0]  %s581, 256, %s7, [#allocation4], 128, 128, 8
    $region49: #{tpu_custom_call.1} parent=1 // pred_fallthru
      _
    // Predicated region
    $region50: #{tpu_custom_call.1} parent=1 // pred_check
      _
    $region51: #{tpu_custom_call.1} parent=1 // pred_check_branch
      %588 = sbr.rel (0) target = $region53
    $region52: #{tpu_custom_call.1} parent=1 // pred_region
      %589 = dma.done [#allocation4], 256
    $region53: #{tpu_custom_call.1} parent=1 // pred_fallthru
      _
    %590 = vsyncpa [#allocation3], 1
    %591 = vsyncpa [#allocation6], 1
    %592 = vsyncpa [#allocation9], 1
    %593 = vsyncpa [#allocation4], 1

// kernel: tpu_custom_call.1
$region0: #{tpu_custom_call.1}
  #allocation0 [shape = 'u32[]', space=smem, size = 0x4, offset = 0x4, fixed_abs, tag = 'smem constant byte address 0x4 - core index']
  #allocation1 [shape = 'u32[144,128]{1,0:T(1,128)}', space=vmem, size = 0x12000, scoped, tag = 'internal scratch']
  %s0 = inlined_call_operand.hbm [shape: bf16[16,128], index: 0, kind: input, shape index: {}]
  %s1 = inlined_call_operand.hbm [shape: bf16[128,128], index: 1, kind: input, shape index: {}]
  %s2 = inlined_call_operand.vmem [shape: f32[1,128], index: 2, kind: input, shape index: {}]
  %s3 = inlined_call_operand.hbm [shape: bf16[2,128,128], index: 3, kind: input, shape index: {}]
  %s4 = inlined_call_operand.vmem [shape: f32[2,1,128], index: 4, kind: input, shape index: {}]
  %s5 = inlined_call_operand.hbm [shape: bf16[128,128], index: 5, kind: input, shape index: {}]
  %s6 = inlined_call_operand.vmem [shape: f32[1,128], index: 6, kind: input, shape index: {}]
  %s7 = inlined_call_operand.hbm [shape: f32[16,128], index: 7, kind: output, shape index: {}]
  %s8 = sld [smem:[#allocation0]]
  $region54: #{tpu_custom_call.1} parent=0
    _
  %s10 = ssub.s32 1, %s8
  %s11 = scalar_select 0, %s10, %s8
  $region1: #{tpu_custom_call.1} parent=0
    #allocation2 [shape = 'u8[4096]{0}', space=vmem, size = 0x1000, scoped, tag = 'input window, operand 0, single buffered']
    #allocation3 [shape = 's32[1]{0}', space=sflag, size = 0x4, scoped, tag = 'scoped memory for tpu_custom_call.1']
    #allocation4 [shape = 's32[1]{0}', space=sflag, size = 0x4, scoped, tag = 'scoped memory for tpu_custom_call.1']
    #allocation5 [shape = 'u8[32768]{0}', space=vmem, size = 0x8000, scoped, tag = 'input window, operand 1, single buffered']
    #allocation6 [shape = 's32[1]{0}', space=sflag, size = 0x4, scoped, tag = 'scoped memory for tpu_custom_call.1']
    #allocation7 [shape = 'u8[65536]{0}', space=vmem, size = 0x10000, scoped, tag = 'input window, operand 3, single buffered']
    #allocation8 [shape = 'u8[32768]{0}', space=vmem, size = 0x8000, scoped, tag = 'input window, operand 5, single buffered']
    #allocation9 [shape = 's32[1]{0}', space=sflag, size = 0x4, scoped, tag = 'scoped memory for tpu_custom_call.1']
    #allocation10 [shape = 'u8[8192]{0}', space=vmem, size = 0x2000, scoped, tag = 'output window, operand 0, single buffered']
    %12 = vsyncpa [#allocation3], 0
    %13 = vsyncpa [#allocation6], 0
    %14 = vsyncpa [#allocation9], 0
    %15 = vsyncpa [#allocation4], 0
    // Predicated region
    $region2: #{tpu_custom_call.1} parent=1 // pred_check
      _
    $region3: #{tpu_custom_call.1} parent=1 // pred_check_branch
      %17 = sbr.rel (0) target = $region5
    $region4: #{tpu_custom_call.1} parent=1 // pred_region
      %s19 = ssub.s32 128, 128
      %20 = vsyncadd [#allocation3], %s19
      %s21 = sshll.u32 [#allocation2], 4
      %s22 = int_to_ptr.vmem [resolvable:$true] %s21
      %27 = dma.hbm_to_vmem [thread:$0]  %s0, 128, %s22, [#allocation3], 64, 64, 4
    $region5: #{tpu_custom_call.1} parent=1 // pred_fallthru
      _
    // Predicated region
    $region6: #{tpu_custom_call.1} parent=1 // pred_check
      _
    $region7: #{tpu_custom_call.1} parent=1 // pred_check_branch
      %29 = sbr.rel (0) target = $region9
    $region8: #{tpu_custom_call.1} parent=1 // pred_region
      %s31 = ssub.s32 1024, 1024
      %32 = vsyncadd [#allocation6], %s31
      %s33 = sshll.u32 [#allocation5], 4
      %s34 = int_to_ptr.vmem [resolvable:$true] %s33
      %39 = dma.hbm_to_vmem [thread:$0]  %s1, 1024, %s34, [#allocation6], 64, 64, 4
    $region9: #{tpu_custom_call.1} parent=1 // pred_fallthru
      _
    // Predicated region
    $region10: #{tpu_custom_call.1} parent=1 // pred_check
      _
    $region11: #{tpu_custom_call.1} parent=1 // pred_check_branch
      %41 = sbr.rel (0) target = $region13
    $region12: #{tpu_custom_call.1} parent=1 // pred_region
      _
    $region13: #{tpu_custom_call.1} parent=1 // pred_fallthru
      _
    // Predicated region
    $region14: #{tpu_custom_call.1} parent=1 // pred_check
      _
    $region15: #{tpu_custom_call.1} parent=1 // pred_check_branch
      %43 = sbr.rel (0) target = $region17
    $region16: #{tpu_custom_call.1} parent=1 // pred_region
      %s45 = ssub.s32 2048, 2048
      %46 = vsyncadd [#allocation6], %s45
      %s47 = sshll.u32 [#allocation7], 4
      %s48 = int_to_ptr.vmem [resolvable:$true] %s47
      %53 = dma.hbm_to_vmem [thread:$0]  %s3, 2048, %s48, [#allocation6], 64, 64, 4
    $region17: #{tpu_custom_call.1} parent=1 // pred_fallthru
      _
    // Predicated region
    $region18: #{tpu_custom_call.1} parent=1 // pred_check
      _
    $region19: #{tpu_custom_call.1} parent=1 // pred_check_branch
      %55 = sbr.rel (0) target = $region21
    $region20: #{tpu_custom_call.1} parent=1 // pred_region
      _
    $region21: #{tpu_custom_call.1} parent=1 // pred_fallthru
      _
    // Predicated region
    $region22: #{tpu_custom_call.1} parent=1 // pred_check
      _
    $region23: #{tpu_custom_call.1} parent=1 // pred_check_branch
      %57 = sbr.rel (0) target = $region25
    $region24: #{tpu_custom_call.1} parent=1 // pred_region
      %s59 = ssub.s32 1024, 1024
      %60 = vsyncadd [#allocation9], %s59
      %s61 = sshll.u32 [#allocation8], 4
      %s62 = int_to_ptr.vmem [resolvable:$true] %s61
      %67 = dma.hbm_to_vmem [thread:$0]  %s5, 1024, %s62, [#allocation9], 64, 64, 4
    $region25: #{tpu_custom_call.1} parent=1 // pred_fallthru
      _
    // Predicated region
    $region26: #{tpu_custom_call.1} parent=1 // pred_check
      _
    $region27: #{tpu_custom_call.1} parent=1 // pred_check_branch
      %69 = sbr.rel (0) target = $region29
    $region28: #{tpu_custom_call.1} parent=1 // pred_region
      _
    $region29: #{tpu_custom_call.1} parent=1 // pred_fallthru
      _
    // Predicated region
    $region30: #{tpu_custom_call.1} parent=1 // pred_check
      _
    $region31: #{tpu_custom_call.1} parent=1 // pred_check_branch
      %71 = sbr.rel (0) target = $region33
    $region32: #{tpu_custom_call.1} parent=1 // pred_region
      %72 = dma.done [#allocation3], 128
    $region33: #{tpu_custom_call.1} parent=1 // pred_fallthru
      _
    // Predicated region
    $region34: #{tpu_custom_call.1} parent=1 // pred_check
      _
    $region35: #{tpu_custom_call.1} parent=1 // pred_check_branch
      %74 = sbr.rel (0) target = $region37
    $region36: #{tpu_custom_call.1} parent=1 // pred_region
      %75 = dma.done [#allocation6], 1024
    $region37: #{tpu_custom_call.1} parent=1 // pred_fallthru
      _
    // Predicated region
    $region38: #{tpu_custom_call.1} parent=1 // pred_check
      _
    $region39: #{tpu_custom_call.1} parent=1 // pred_check_branch
      %77 = sbr.rel (0) target = $region41
    $region40: #{tpu_custom_call.1} parent=1 // pred_region
      %78 = dma.done [#allocation6], 2048
    $region41: #{tpu_custom_call.1} parent=1 // pred_fallthru
      _
    // Predicated region
    $region42: #{tpu_custom_call.1} parent=1 // pred_check
      _
    $region43: #{tpu_custom_call.1} parent=1 // pred_check_branch
      %80 = sbr.rel (0) target = $region45
    $region44: #{tpu_custom_call.1} parent=1 // pred_region
      %81 = dma.done [#allocation9], 1024
    $region45: #{tpu_custom_call.1} parent=1 // pred_fallthru
      _
    %v83 = vld [vmem:[#allocation2] sm:$0xf]
    %v84 = vld [vmem:[#allocation2 + $0x4] sm:$0xf]
    %v85 = vld [vmem:[#allocation5] sm:$0xf]
    %v86 = vld [vmem:[#allocation5 + $0x4] sm:$0xf]
    %v87 = vld [vmem:[#allocation5 + $0x8] sm:$0xf]
    %v88 = vld [vmem:[#allocation5 + $0xc] sm:$0xf]
    %v89 = vld [vmem:[#allocation5 + $0x10] sm:$0xf]
    %v90 = vld [vmem:[#allocation5 + $0x14] sm:$0xf]
    %v91 = vld [vmem:[#allocation5 + $0x18] sm:$0xf]
    %v92 = vld [vmem:[#allocation5 + $0x1c] sm:$0xf]
    %v93 = vld [vmem:[#allocation5 + $0x20] sm:$0xf]
    %v94 = vld [vmem:[#allocation5 + $0x24] sm:$0xf]
    %v95 = vld [vmem:[#allocation5 + $0x28] sm:$0xf]
    %v96 = vld [vmem:[#allocation5 + $0x2c] sm:$0xf]
    %v97 = vld [vmem:[#allocation5 + $0x30] sm:$0xf]
    %v98 = vld [vmem:[#allocation5 + $0x34] sm:$0xf]
    %v99 = vld [vmem:[#allocation5 + $0x38] sm:$0xf]
    %v100 = vld [vmem:[#allocation5 + $0x3c] sm:$0xf]
    %v101 = vld [vmem:[%s2] sm:$0x1]
    %v103 = vlaneseq
    %v104 = vshrl.u32 %v103, 7
    %v105 = vsub.s32 0, %v104
    %v106 = vrot.slane %v101, %v105
    %v110 = vunpack.c.l.b16 %v83
    %v111 = vunpack.c.l.b16 %v84
    %v112 = vpack.c.b16 %v111, %v110
    %v130 = vunpack.c.l.b16 %v85
    %v131 = vunpack.c.l.b16 %v86
    %v132 = vunpack.c.l.b16 %v87
    %v133 = vunpack.c.l.b16 %v88
    %v134 = vunpack.c.l.b16 %v89
    %v135 = vunpack.c.l.b16 %v90
    %v136 = vunpack.c.l.b16 %v91
    %v137 = vunpack.c.l.b16 %v92
    %v138 = vunpack.c.l.b16 %v93
    %v139 = vunpack.c.l.b16 %v94
    %v140 = vunpack.c.l.b16 %v95
    %v141 = vunpack.c.l.b16 %v96
    %v142 = vunpack.c.l.b16 %v97
    %v143 = vunpack.c.l.b16 %v98
    %v144 = vunpack.c.l.b16 %v99
    %v145 = vunpack.c.l.b16 %v100
    %v146 = vpack.c.b16 %v131, %v130
    %v147 = vpack.c.b16 %v133, %v132
    %v148 = vpack.c.b16 %v135, %v134
    %v149 = vpack.c.b16 %v137, %v136
    %v150 = vpack.c.b16 %v139, %v138
    %v151 = vpack.c.b16 %v141, %v140
    %v152 = vpack.c.b16 %v143, %v142
    %v153 = vpack.c.b16 %v145, %v144
    %162 = vmatprep.subr.bf16.mxu0 0
    %163 = vmatpush1.bf16.msra.mxu0 %v153
    %164 = vmatprep.subr.bf16.mxu0 0
    %165 = vmatpush1.bf16.msra.mxu0 %v152
    %166 = vmatprep.subr.bf16.mxu0 0
    %167 = vmatpush1.bf16.msra.mxu0 %v151
    %168 = vmatprep.subr.bf16.mxu0 0
    %169 = vmatpush1.bf16.msra.mxu0 %v150
    %170 = vmatprep.subr.bf16.mxu0 0
    %171 = vmatpush1.bf16.msra.mxu0 %v149
    %172 = vmatprep.subr.bf16.mxu0 0
    %173 = vmatpush1.bf16.msra.mxu0 %v148
    %174 = vmatprep.subr.bf16.mxu0 0
    %175 = vmatpush1.bf16.msra.mxu0 %v147
    %176 = vmatprep.subr.bf16.mxu0 0
    %177 = vmatpush1.bf16.msra.mxu0 %v146
    %178 = vmatprep.subr.bf16.mxu0 0
    %179 = vmatpush2.bf16.msra.mxu0 0
    %180 = vmatprep.subr.bf16.mxu0 0
    %181 = vmatpush2.bf16.msra.mxu0 0
    %182 = vmatprep.subr.bf16.mxu0 0
    %183 = vmatpush2.bf16.msra.mxu0 0
    %184 = vmatprep.subr.bf16.mxu0 0
    %185 = vmatpush2.bf16.msra.mxu0 0
    %186 = vmatprep.subr.bf16.mxu0 0
    %187 = vmatpush2.bf16.msra.mxu0 0
    %188 = vmatprep.subr.bf16.mxu0 0
    %189 = vmatpush2.bf16.msra.mxu0 0
    %190 = vmatprep.subr.bf16.mxu0 0
    %191 = vmatpush2.bf16.msra.mxu0 0
    %192 = vmatprep.subr.bf16.mxu0 0
    %193 = vmatpush2.bf16.msra.mxu0 0
    %194 = vmatprep.mubr.bf16.mxu0 0
    %195 = vmatmul.mubr.bf16.gmra.mxu0 %v112
    %v196 = vpop.f32.mrf.mxu0
    %v197 = vadd.f32 %v106, %v196
    %v198 = vpop.f32.mrf.mxu0
    %v199 = vpop.f32.mrf.mxu0
    %v200 = vadd.f32 %v106, %v199
    %v201 = vpop.f32.mrf.mxu0
    %202 = vdwg.mxu0
    %v203 = vmax.f32 %v197, 0.0
    %v204 = vmax.f32 %v200, 0.0
    %v205 = vpack.c.bf16 %v204, %v203
    %v206 = vld [vmem:[#allocation7] sm:$0xf]
    %v207 = vld [vmem:[#allocation7 + $0x4] sm:$0xf]
    %v208 = vld [vmem:[#allocation7 + $0x8] sm:$0xf]
    %v209 = vld [vmem:[#allocation7 + $0xc] sm:$0xf]
    %v210 = vld [vmem:[#allocation7 + $0x10] sm:$0xf]
    %v211 = vld [vmem:[#allocation7 + $0x14] sm:$0xf]
    %v212 = vld [vmem:[#allocation7 + $0x18] sm:$0xf]
    %v213 = vld [vmem:[#allocation7 + $0x1c] sm:$0xf]
    %v214 = vld [vmem:[#allocation7 + $0x20] sm:$0xf]
    %v215 = vld [vmem:[#allocation7 + $0x24] sm:$0xf]
    %v216 = vld [vmem:[#allocation7 + $0x28] sm:$0xf]
    %v217 = vld [vmem:[#allocation7 + $0x2c] sm:$0xf]
    %v218 = vld [vmem:[#allocation7 + $0x30] sm:$0xf]
    %v219 = vld [vmem:[#allocation7 + $0x34] sm:$0xf]
    %v220 = vld [vmem:[#allocation7 + $0x38] sm:$0xf]
    %v221 = vld [vmem:[#allocation7 + $0x3c] sm:$0xf]
    %v222 = vld [vmem:[%s4] sm:$0x1]
    %v224 = vlaneseq
    %v225 = vshrl.u32 %v224, 7
    %v226 = vsub.s32 0, %v225
    %v227 = vrot.slane %v222, %v226
    %v245 = vunpack.c.l.b16 %v206
    %v246 = vunpack.c.l.b16 %v207
    %v247 = vunpack.c.l.b16 %v208
    %v248 = vunpack.c.l.b16 %v209
    %v249 = vunpack.c.l.b16 %v210
    %v250 = vunpack.c.l.b16 %v211
    %v251 = vunpack.c.l.b16 %v212
    %v252 = vunpack.c.l.b16 %v213
    %v253 = vunpack.c.l.b16 %v214
    %v254 = vunpack.c.l.b16 %v215
    %v255 = vunpack.c.l.b16 %v216
    %v256 = vunpack.c.l.b16 %v217
    %v257 = vunpack.c.l.b16 %v218
    %v258 = vunpack.c.l.b16 %v219
    %v259 = vunpack.c.l.b16 %v220
    %v260 = vunpack.c.l.b16 %v221
    %v261 = vpack.c.b16 %v246, %v245
    %v262 = vpack.c.b16 %v248, %v247
    %v263 = vpack.c.b16 %v250, %v249
    %v264 = vpack.c.b16 %v252, %v251
    %v265 = vpack.c.b16 %v254, %v253
    %v266 = vpack.c.b16 %v256, %v255
    %v267 = vpack.c.b16 %v258, %v257
    %v268 = vpack.c.b16 %v260, %v259
    %277 = vmatprep.subr.bf16.mxu0 0
    %278 = vmatpush1.bf16.msra.mxu0 %v268
    %279 = vmatprep.subr.bf16.mxu0 0
    %280 = vmatpush1.bf16.msra.mxu0 %v267
    %281 = vmatprep.subr.bf16.mxu0 0
    %282 = vmatpush1.bf16.msra.mxu0 %v266
    %283 = vmatprep.subr.bf16.mxu0 0
    %284 = vmatpush1.bf16.msra.mxu0 %v265
    %285 = vmatprep.subr.bf16.mxu0 0
    %286 = vmatpush1.bf16.msra.mxu0 %v264
    %287 = vmatprep.subr.bf16.mxu0 0
    %288 = vmatpush1.bf16.msra.mxu0 %v263
    %289 = vmatprep.subr.bf16.mxu0 0
    %290 = vmatpush1.bf16.msra.mxu0 %v262
    %291 = vmatprep.subr.bf16.mxu0 0
    %292 = vmatpush1.bf16.msra.mxu0 %v261
    %293 = vmatprep.subr.bf16.mxu0 0
    %294 = vmatpush2.bf16.msra.mxu0 0
    %295 = vmatprep.subr.bf16.mxu0 0
    %296 = vmatpush2.bf16.msra.mxu0 0
    %297 = vmatprep.subr.bf16.mxu0 0
    %298 = vmatpush2.bf16.msra.mxu0 0
    %299 = vmatprep.subr.bf16.mxu0 0
    %300 = vmatpush2.bf16.msra.mxu0 0
    %301 = vmatprep.subr.bf16.mxu0 0
    %302 = vmatpush2.bf16.msra.mxu0 0
    %303 = vmatprep.subr.bf16.mxu0 0
    %304 = vmatpush2.bf16.msra.mxu0 0
    %305 = vmatprep.subr.bf16.mxu0 0
    %306 = vmatpush2.bf16.msra.mxu0 0
    %307 = vmatprep.subr.bf16.mxu0 0
    %308 = vmatpush2.bf16.msra.mxu0 0
    %309 = vmatprep.mubr.bf16.mxu0 0
    %310 = vmatmul.mubr.bf16.gmra.mxu0 %v205
    %v311 = vpop.f32.mrf.mxu0
    %v312 = vadd.f32 %v227, %v311
    %v313 = vpop.f32.mrf.mxu0
    %v314 = vpop.f32.mrf.mxu0
    %v315 = vadd.f32 %v227, %v314
    %v316 = vpop.f32.mrf.mxu0
    %317 = vdwg.mxu0
    %v318 = vmax.f32 %v312, 0.0
    %v319 = vmax.f32 %v315, 0.0
    %v320 = vpack.c.bf16 %v319, %v318
    %s321 = scalar_lea.vmem [#allocation7], 64
    %v322 = vld [vmem:[%s321] sm:$0xf]
    %v323 = vld [vmem:[%s321 + $0x4] sm:$0xf]
    %v324 = vld [vmem:[%s321 + $0x8] sm:$0xf]
    %v325 = vld [vmem:[%s321 + $0xc] sm:$0xf]
    %v326 = vld [vmem:[%s321 + $0x10] sm:$0xf]
    %v327 = vld [vmem:[%s321 + $0x14] sm:$0xf]
    %v328 = vld [vmem:[%s321 + $0x18] sm:$0xf]
    %v329 = vld [vmem:[%s321 + $0x1c] sm:$0xf]
    %v330 = vld [vmem:[%s321 + $0x20] sm:$0xf]
    %v331 = vld [vmem:[%s321 + $0x24] sm:$0xf]
    %v332 = vld [vmem:[%s321 + $0x28] sm:$0xf]
    %v333 = vld [vmem:[%s321 + $0x2c] sm:$0xf]
    %v334 = vld [vmem:[%s321 + $0x30] sm:$0xf]
    %v335 = vld [vmem:[%s321 + $0x34] sm:$0xf]
    %v336 = vld [vmem:[%s321 + $0x38] sm:$0xf]
    %v337 = vld [vmem:[%s321 + $0x3c] sm:$0xf]
    %s338 = scalar_lea.vmem %s4, 1
    %v339 = vld [vmem:[%s338] sm:$0x1]
    %v341 = vlaneseq
    %v342 = vshrl.u32 %v341, 7
    %v343 = vsub.s32 0, %v342
    %v344 = vrot.slane %v339, %v343
    %v362 = vunpack.c.l.b16 %v322
    %v363 = vunpack.c.l.b16 %v323
    %v364 = vunpack.c.l.b16 %v324
    %v365 = vunpack.c.l.b16 %v325
    %v366 = vunpack.c.l.b16 %v326
    %v367 = vunpack.c.l.b16 %v327
    %v368 = vunpack.c.l.b16 %v328
    %v369 = vunpack.c.l.b16 %v329
    %v370 = vunpack.c.l.b16 %v330
    %v371 = vunpack.c.l.b16 %v331
    %v372 = vunpack.c.l.b16 %v332
    %v373 = vunpack.c.l.b16 %v333
    %v374 = vunpack.c.l.b16 %v334
    %v375 = vunpack.c.l.b16 %v335
    %v376 = vunpack.c.l.b16 %v336
    %v377 = vunpack.c.l.b16 %v337
    %v378 = vpack.c.b16 %v363, %v362
    %v379 = vpack.c.b16 %v365, %v364
    %v380 = vpack.c.b16 %v367, %v366
    %v381 = vpack.c.b16 %v369, %v368
    %v382 = vpack.c.b16 %v371, %v370
    %v383 = vpack.c.b16 %v373, %v372
    %v384 = vpack.c.b16 %v375, %v374
    %v385 = vpack.c.b16 %v377, %v376
    %394 = vmatprep.subr.bf16.mxu0 0
    %395 = vmatpush1.bf16.msra.mxu0 %v385
    %396 = vmatprep.subr.bf16.mxu0 0
    %397 = vmatpush1.bf16.msra.mxu0 %v384
    %398 = vmatprep.subr.bf16.mxu0 0
    %399 = vmatpush1.bf16.msra.mxu0 %v383
    %400 = vmatprep.subr.bf16.mxu0 0
    %401 = vmatpush1.bf16.msra.mxu0 %v382
    %402 = vmatprep.subr.bf16.mxu0 0
    %403 = vmatpush1.bf16.msra.mxu0 %v381
    %404 = vmatprep.subr.bf16.mxu0 0
    %405 = vmatpush1.bf16.msra.mxu0 %v380
    %406 = vmatprep.subr.bf16.mxu0 0
    %407 = vmatpush1.bf16.msra.mxu0 %v379
    %408 = vmatprep.subr.bf16.mxu0 0
    %409 = vmatpush1.bf16.msra.mxu0 %v378
    %410 = vmatprep.subr.bf16.mxu0 0
    %411 = vmatpush2.bf16.msra.mxu0 0
    %412 = vmatprep.subr.bf16.mxu0 0
    %413 = vmatpush2.bf16.msra.mxu0 0
    %414 = vmatprep.subr.bf16.mxu0 0
    %415 = vmatpush2.bf16.msra.mxu0 0
    %416 = vmatprep.subr.bf16.mxu0 0
    %417 = vmatpush2.bf16.msra.mxu0 0
    %418 = vmatprep.subr.bf16.mxu0 0
    %419 = vmatpush2.bf16.msra.mxu0 0
    %420 = vmatprep.subr.bf16.mxu0 0
    %421 = vmatpush2.bf16.msra.mxu0 0
    %422 = vmatprep.subr.bf16.mxu0 0
    %423 = vmatpush2.bf16.msra.mxu0 0
    %424 = vmatprep.subr.bf16.mxu0 0
    %425 = vmatpush2.bf16.msra.mxu0 0
    %426 = vmatprep.mubr.bf16.mxu0 0
    %427 = vmatmul.mubr.bf16.gmra.mxu0 %v320
    %v428 = vpop.f32.mrf.mxu0
    %v429 = vadd.f32 %v344, %v428
    %v430 = vpop.f32.mrf.mxu0
    %v431 = vpop.f32.mrf.mxu0
    %v432 = vadd.f32 %v344, %v431
    %v433 = vpop.f32.mrf.mxu0
    %434 = vdwg.mxu0
    %v435 = vmax.f32 %v429, 0.0
    %v436 = vmax.f32 %v432, 0.0
    %v437 = vpack.c.bf16 %v436, %v435
    %v438 = vld [vmem:[#allocation8] sm:$0xf]
    %v439 = vld [vmem:[#allocation8 + $0x4] sm:$0xf]
    %v440 = vld [vmem:[#allocation8 + $0x8] sm:$0xf]
    %v441 = vld [vmem:[#allocation8 + $0xc] sm:$0xf]
    %v442 = vld [vmem:[#allocation8 + $0x10] sm:$0xf]
    %v443 = vld [vmem:[#allocation8 + $0x14] sm:$0xf]
    %v444 = vld [vmem:[#allocation8 + $0x18] sm:$0xf]
    %v445 = vld [vmem:[#allocation8 + $0x1c] sm:$0xf]
    %v446 = vld [vmem:[#allocation8 + $0x20] sm:$0xf]
    %v447 = vld [vmem:[#allocation8 + $0x24] sm:$0xf]
    %v448 = vld [vmem:[#allocation8 + $0x28] sm:$0xf]
    %v449 = vld [vmem:[#allocation8 + $0x2c] sm:$0xf]
    %v450 = vld [vmem:[#allocation8 + $0x30] sm:$0xf]
    %v451 = vld [vmem:[#allocation8 + $0x34] sm:$0xf]
    %v452 = vld [vmem:[#allocation8 + $0x38] sm:$0xf]
    %v453 = vld [vmem:[#allocation8 + $0x3c] sm:$0xf]
    %v454 = vld [vmem:[%s6] sm:$0x1]
    %v456 = vlaneseq
    %v457 = vshrl.u32 %v456, 7
    %v458 = vsub.s32 0, %v457
    %v459 = vrot.slane %v454, %v458
    %v477 = vunpack.c.l.b16 %v438
    %v478 = vunpack.c.l.b16 %v439
    %v479 = vunpack.c.l.b16 %v440
    %v480 = vunpack.c.l.b16 %v441
    %v481 = vunpack.c.l.b16 %v442
    %v482 = vunpack.c.l.b16 %v443
    %v483 = vunpack.c.l.b16 %v444
    %v484 = vunpack.c.l.b16 %v445
    %v485 = vunpack.c.l.b16 %v446
    %v486 = vunpack.c.l.b16 %v447
    %v487 = vunpack.c.l.b16 %v448
    %v488 = vunpack.c.l.b16 %v449
    %v489 = vunpack.c.l.b16 %v450
    %v490 = vunpack.c.l.b16 %v451
    %v491 = vunpack.c.l.b16 %v452
    %v492 = vunpack.c.l.b16 %v453
    %v493 = vpack.c.b16 %v478, %v477
    %v494 = vpack.c.b16 %v480, %v479
    %v495 = vpack.c.b16 %v482, %v481
    %v496 = vpack.c.b16 %v484, %v483
    %v497 = vpack.c.b16 %v486, %v485
    %v498 = vpack.c.b16 %v488, %v487
    %v499 = vpack.c.b16 %v490, %v489
    %v500 = vpack.c.b16 %v492, %v491
    %509 = vmatprep.subr.bf16.mxu0 0
    %510 = vmatpush1.bf16.msra.mxu0 %v500
    %511 = vmatprep.subr.bf16.mxu0 0
    %512 = vmatpush1.bf16.msra.mxu0 %v499
    %513 = vmatprep.subr.bf16.mxu0 0
    %514 = vmatpush1.bf16.msra.mxu0 %v498
    %515 = vmatprep.subr.bf16.mxu0 0
    %516 = vmatpush1.bf16.msra.mxu0 %v497
    %517 = vmatprep.subr.bf16.mxu0 0
    %518 = vmatpush1.bf16.msra.mxu0 %v496
    %519 = vmatprep.subr.bf16.mxu0 0
    %520 = vmatpush1.bf16.msra.mxu0 %v495
    %521 = vmatprep.subr.bf16.mxu0 0
    %522 = vmatpush1.bf16.msra.mxu0 %v494
    %523 = vmatprep.subr.bf16.mxu0 0
    %524 = vmatpush1.bf16.msra.mxu0 %v493
    %525 = vmatprep.subr.bf16.mxu0 0
    %526 = vmatpush2.bf16.msra.mxu0 0
    %527 = vmatprep.subr.bf16.mxu0 0
    %528 = vmatpush2.bf16.msra.mxu0 0
    %529 = vmatprep.subr.bf16.mxu0 0
    %530 = vmatpush2.bf16.msra.mxu0 0
    %531 = vmatprep.subr.bf16.mxu0 0
    %532 = vmatpush2.bf16.msra.mxu0 0
    %533 = vmatprep.subr.bf16.mxu0 0
    %534 = vmatpush2.bf16.msra.mxu0 0
    %535 = vmatprep.subr.bf16.mxu0 0
    %536 = vmatpush2.bf16.msra.mxu0 0
    %537 = vmatprep.subr.bf16.mxu0 0
    %538 = vmatpush2.bf16.msra.mxu0 0
    %539 = vmatprep.subr.bf16.mxu0 0
    %540 = vmatpush2.bf16.msra.mxu0 0
    %541 = vmatprep.mubr.bf16.mxu0 0
    %542 = vmatmul.mubr.bf16.gmra.mxu0 %v437
    %v543 = vpop.f32.mrf.mxu0
    %v544 = vadd.f32 %v459, %v543
    %v545 = vpop.f32.mrf.mxu0
    %v546 = vpop.f32.mrf.mxu0
    %v547 = vadd.f32 %v459, %v546
    %v548 = vpop.f32.mrf.mxu0
    %549 = vdwg.mxu0
    %v550 = vlaneseq
    %v551 = vand.u32 %v550, 127
    %vm552 = vcmp.lt.s32.totalorder %v551, 16
    %v553 = vsel %vm552, %v544, -1e+30
    %v554 = vsel %vm552, %v547, -1e+30
    %555 = vmax.xlane.f32.xlu0 %v553
    %v556 = vpop.xlane.xlu0 %555
    %557 = vmax.xlane.f32.xlu0 %v554
    %v558 = vpop.xlane.xlu0 %557
    %v559 = vsub.f32 %v553, %v556
    %v560 = vsub.f32 %v554, %v558
    %v561 = vmul.f32 %v559, 1.442695
    %v562 = vpow.pop %v561
    %v563 = vmul.f32 %v560, 1.442695
    %v564 = vpow.pop %v563
    %565 = vadd.xlane.f32.xlu0 %v562
    %v566 = vpop.xlane.xlu0 %565
    %567 = vadd.xlane.f32.xlu0 %v564
    %v568 = vpop.xlane.xlu0 %567
    %v569 = vrcp.pop %v566
    %v570 = vmul.f32 %v562, %v569
    %v571 = vrcp.pop %v568
    %v572 = vmul.f32 %v564, %v571
    %573 = vst [vmem:[#allocation10] sm:$0xff] %v570
    %574 = vst [vmem:[#allocation10 + $0x8] sm:$0xff] %v572
    // Predicated region
    $region46: #{tpu_custom_call.1} parent=1 // pred_check
      _
    $region47: #{tpu_custom_call.1} parent=1 // pred_check_branch
      %576 = sbr.rel (0) target = $region49
    $region48: #{tpu_custom_call.1} parent=1 // pred_region
      %s578 = ssub.s32 256, 256
      %579 = vsyncadd [#allocation4], %s578
      %s580 = sshll.u32 [#allocation10], 4
      %s581 = int_to_ptr.vmem [resolvable:$true] %s580
      %586 = dma.vmem_to_hbm [thread:$0]  %s581, 256, %s7, [#allocation4], 128, 128, 8
    $region49: #{tpu_custom_call.1} parent=1 // pred_fallthru
      _
    // Predicated region
    $region50: #{tpu_custom_call.1} parent=1 // pred_check
      _
    $region51: #{tpu_custom_call.1} parent=1 // pred_check_branch
      %588 = sbr.rel (0) target = $region53
    $region52: #{tpu_custom_call.1} parent=1 // pred_region
      %589 = dma.done [#allocation4], 256
    $region53: #{tpu_custom_call.1} parent=1 // pred_fallthru
      _
    %590 = vsyncpa [#allocation3], 1
    %591 = vsyncpa [#allocation6], 1
    %592 = vsyncpa [#allocation9], 1
    %593 = vsyncpa [#allocation4], 1

</llo_original>
